<compile_context>
chip_gen: v7x
topology: tpu7x:2x2x1
jax: 0.10.0
libtpu: 0.0.40
codegen_flags: <defaults>
</compile_context>

<pallas_src>
import math
import functools

import jax
import jax.numpy as jnp
from jax.experimental import pallas as pl
from jax.experimental.pallas import tpu as pltpu

_LN_EPS = 1e-5
_GELU_C = math.sqrt(2.0 / math.pi)
# Scoped VMEM budget: fits bf16-resident GPT-2-small weights (double buffered)
# plus activation tiles, and stays under v7x's 64 MiB physical VMEM.
_VMEM_LIMIT_BYTES = 48 * 1024 * 1024


def _layernorm_f32(h, gamma, beta):
    mean = jnp.mean(h, axis=-1, keepdims=True)
    var = jnp.mean(jnp.square(h - mean), axis=-1, keepdims=True)
    return (h - mean) * jax.lax.rsqrt(var + _LN_EPS) * gamma + beta


# ----------------------------------------------------------------------------
# Kernel A: ln1 + QKV projection  (grid: (B, S//T))
# ----------------------------------------------------------------------------
def _qkv_kernel(x_ref, g_ref, b_ref, w_qkv_ref, b_qkv_ref,
                q_ref, k_ref, v_ref, *, n_embd: int):
    x = x_ref[0]                                   # (T, E) fp32
    gamma = g_ref[...]                             # (1, E) hoisted loads
    beta = b_ref[...]
    h = _layernorm_f32(x, gamma, beta)             # fp32 stats
    qkv = jnp.dot(h.astype(jnp.bfloat16), w_qkv_ref[...],
                  preferred_element_type=jnp.float32) + b_qkv_ref[...]
    q_ref[0, :, :] = qkv[:, 0 * n_embd:1 * n_embd].astype(jnp.bfloat16)
    k_ref[0, :, :] = qkv[:, 1 * n_embd:2 * n_embd].astype(jnp.bfloat16)
    v_ref[0, :, :] = qkv[:, 2 * n_embd:3 * n_embd].astype(jnp.bfloat16)


# ----------------------------------------------------------------------------
# Kernel B: per-head causal flash attention  (grid: (B, H, Sq//T, Skv//T))
# ----------------------------------------------------------------------------
def _flash_attn_kernel(q_ref, k_ref, v_ref, o_ref,
                       m_scr, l_scr, acc_scr, *, tile: int, scale: float):
    qi = pl.program_id(2)
    ki = pl.program_id(3)

    @pl.when(ki == 0)
    def _init():
        m_scr[...] = jnp.full_like(m_scr, -jnp.inf)
        l_scr[...] = jnp.zeros_like(l_scr)
        acc_scr[...] = jnp.zeros_like(acc_scr)

    # Causal: kv tiles strictly above the diagonal contribute nothing — skip.
    @pl.when(ki <= qi)
    def _update():
        q = q_ref[0, 0]                            # (T, D) bf16
        k = k_ref[0, 0]
        v = v_ref[0, 0]
        s = jax.lax.dot_general(q, k, (((1,), (1,)), ((), ())),
                                preferred_element_type=jnp.float32) * scale
        row = qi * tile + jax.lax.broadcasted_iota(jnp.int32, (tile, tile), 0)
        col = ki * tile + jax.lax.broadcasted_iota(jnp.int32, (tile, tile), 1)
        s = jnp.where(row >= col, s, -1e30)

        m_prev = m_scr[...]
        m_new = jnp.maximum(m_prev, jnp.max(s, axis=-1, keepdims=True))
        alpha = jnp.exp(m_prev - m_new)
        p = jnp.exp(s - m_new)
        l_scr[...] = alpha * l_scr[...] + jnp.sum(p, axis=-1, keepdims=True)
        acc_scr[...] = alpha * acc_scr[...] + jnp.dot(
            p.astype(jnp.bfloat16), v, preferred_element_type=jnp.float32)
        m_scr[...] = m_new

    @pl.when(ki == pl.num_programs(3) - 1)
    def _finalize():
        inv_l = pl.reciprocal(l_scr[...], approx=True)   # EUP vrcp
        o_ref[0, 0] = (acc_scr[...] * inv_l).astype(o_ref.dtype)


# ----------------------------------------------------------------------------
# Kernel C: attention out-proj + residual + ln2 + MLP + residual (grid: (B, S//T))
# ----------------------------------------------------------------------------
def _proj_mlp_kernel(x_ref, a_ref, w_ap_ref, b_ap_ref, g2_ref, b2_ref,
                     w_fc_ref, b_fc_ref, w_mp_ref, b_mp_ref, o_ref):
    x = x_ref[0]                                   # (T, E) fp32 residual
    a = a_ref[0]                                   # (T, E) bf16 attention out
    y = x + jnp.dot(a, w_ap_ref[...],
                    preferred_element_type=jnp.float32) + b_ap_ref[...]

    h = _layernorm_f32(y, g2_ref[...], b2_ref[...])
    h = jnp.dot(h.astype(jnp.bfloat16), w_fc_ref[...],
                preferred_element_type=jnp.float32) + b_fc_ref[...]
    # GELU (tanh approximation), fp32 elementwise (v5e has no bf16 VPU/EUP)
    h = 0.5 * h * (1.0 + jnp.tanh(_GELU_C * (h + 0.044715 * h * h * h)))
    h = jnp.dot(h.astype(jnp.bfloat16), w_mp_ref[...],
                preferred_element_type=jnp.float32) + b_mp_ref[...]
    o_ref[0, :, :] = (y + h).astype(o_ref.dtype)


# ----------------------------------------------------------------------------
# Wrapper
# ----------------------------------------------------------------------------
@functools.partial(jax.jit, static_argnames=("n_head", "q_tile"))
def gpt2_block(x, params, *, n_head: int, q_tile: int | None = None):
    B, S, E = x.shape
    H = n_head
    D = E // H
    T = q_tile if q_tile is not None else min(128, S)
    assert S % T == 0, "seq_len must be divisible by the tile size"
    assert E % H == 0

    bf16 = jnp.bfloat16
    w_qkv = params["w_qkv"].astype(bf16)
    w_ap = params["w_attnproj"].astype(bf16)
    w_fc = params["w_fc"].astype(bf16)
    w_mp = params["w_mlpproj"].astype(bf16)

    nT = S // T

    def const2d(arr):   # grid-invariant resident weight / bias block
        return pl.BlockSpec(arr.shape, lambda *_: (0, 0))

    # -------- Kernel A: ln1 + QKV --------------------------------------
    q, k, v = pl.pallas_call(
        functools.partial(_qkv_kernel, n_embd=E),
        out_shape=(jax.ShapeDtypeStruct((B, S, E), bf16),
                   jax.ShapeDtypeStruct((B, S, E), bf16),
                   jax.ShapeDtypeStruct((B, S, E), bf16)),
        grid_spec=pltpu.PrefetchScalarGridSpec(
            num_scalar_prefetch=0,
            grid=(B, nT),
            in_specs=[pl.BlockSpec((1, T, E), lambda b, i: (b, i, 0)),
                      const2d(params["ln1_g"]), const2d(params["ln1_b"]),
                      const2d(w_qkv), const2d(params["b_qkv"])],
            out_specs=[pl.BlockSpec((1, T, E), lambda b, i: (b, i, 0))] * 3),
        compiler_params=pltpu.CompilerParams(
            dimension_semantics=("parallel", "parallel"),
            vmem_limit_bytes=_VMEM_LIMIT_BYTES),
    )(x, params["ln1_g"], params["ln1_b"], w_qkv, params["b_qkv"])

    # Head split is pure layout plumbing: let XLA do it outside the kernel.
    def to_heads(t):
        return t.reshape(B, S, H, D).transpose(0, 2, 1, 3)   # (B, H, S, D)
    qh, kh, vh = to_heads(q), to_heads(k), to_heads(v)

    # -------- Kernel B: flash attention ---------------------------------
    scale = 1.0 / math.sqrt(D)
    attn_heads = pl.pallas_call(
        functools.partial(_flash_attn_kernel, tile=T, scale=scale),
        out_shape=jax.ShapeDtypeStruct((B, H, S, D), bf16),
        grid_spec=pltpu.PrefetchScalarGridSpec(
            num_scalar_prefetch=0,
            grid=(B, H, nT, nT),
            in_specs=[
                pl.BlockSpec((1, 1, T, D), lambda b, h, i, j: (b, h, i, 0)),
                # Clamp kv index above the diagonal -> repeats the previous
                # block, so skipped (masked-out) tiles cost no extra DMA.
                pl.BlockSpec((1, 1, T, D),
                             lambda b, h, i, j: (b, h, jnp.minimum(j, i), 0)),
                pl.BlockSpec((1, 1, T, D),
                             lambda b, h, i, j: (b, h, jnp.minimum(j, i), 0)),
            ],
            out_specs=pl.BlockSpec((1, 1, T, D), lambda b, h, i, j: (b, h, i, 0)),
            scratch_shapes=[pltpu.VMEM((T, 1), jnp.float32),
                            pltpu.VMEM((T, 1), jnp.float32),
                            pltpu.VMEM((T, D), jnp.float32)]),
        compiler_params=pltpu.CompilerParams(
            dimension_semantics=("parallel", "parallel", "parallel", "arbitrary"),
            vmem_limit_bytes=_VMEM_LIMIT_BYTES),
    )(qh, kh, vh)

    # Head merge back to (B, S, E) — again layout plumbing done by XLA.
    attn = attn_heads.transpose(0, 2, 1, 3).reshape(B, S, E)

    # -------- Kernel C: out-proj + residual + ln2 + MLP + residual -------
    out = pl.pallas_call(
        _proj_mlp_kernel,
        out_shape=jax.ShapeDtypeStruct((B, S, E), jnp.float32),
        grid_spec=pltpu.PrefetchScalarGridSpec(
            num_scalar_prefetch=0,
            grid=(B, nT),
            in_specs=[pl.BlockSpec((1, T, E), lambda b, i: (b, i, 0)),
                      pl.BlockSpec((1, T, E), lambda b, i: (b, i, 0)),
                      const2d(w_ap), const2d(params["b_attnproj"]),
                      const2d(params["ln2_g"]), const2d(params["ln2_b"]),
                      const2d(w_fc), const2d(params["b_fc"]),
                      const2d(w_mp), const2d(params["b_mlpproj"])],
            out_specs=pl.BlockSpec((1, T, E), lambda b, i: (b, i, 0))),
        compiler_params=pltpu.CompilerParams(
            dimension_semantics=("parallel", "parallel"),
            vmem_limit_bytes=_VMEM_LIMIT_BYTES),
    )(x, attn, w_ap, params["b_attnproj"], params["ln2_g"], params["ln2_b"],
      w_fc, params["b_fc"], w_mp, params["b_mlpproj"])
    return out


# ----------------------------------------------------------------------------
# Pure-JAX fp32 reference (for correctness check)
# ----------------------------------------------------------------------------
def gpt2_block_ref(x, p, *, n_head: int):
    B, S, E = x.shape
    D = E // n_head

    def ln(h, g, b):
        m = jnp.mean(h, axis=-1, keepdims=True)
        v = jnp.mean((h - m) ** 2, axis=-1, keepdims=True)
        return (h - m) / jnp.sqrt(v + _LN_EPS) * g + b

    h = ln(x, p["ln1_g"], p["ln1_b"])
    qkv = h @ p["w_qkv"] + p["b_qkv"]
    q, k, v = jnp.split(qkv, 3, axis=-1)
    q = q.reshape(B, S, n_head, D).transpose(0, 2, 1, 3)
    k = k.reshape(B, S, n_head, D).transpose(0, 2, 1, 3)
    v = v.reshape(B, S, n_head, D).transpose(0, 2, 1, 3)
    s = jnp.einsum("bhqd,bhkd->bhqk", q, k) / math.sqrt(D)
    mask = jnp.tril(jnp.ones((S, S), bool))
    s = jnp.where(mask, s, -jnp.inf)
    pw = jax.nn.softmax(s, axis=-1)
    a = jnp.einsum("bhqk,bhkd->bhqd", pw, v).transpose(0, 2, 1, 3).reshape(B, S, E)
    x = x + a @ p["w_attnproj"] + p["b_attnproj"]

    h = ln(x, p["ln2_g"], p["ln2_b"])
    h = h @ p["w_fc"] + p["b_fc"]
    h = 0.5 * h * (1.0 + jnp.tanh(_GELU_C * (h + 0.044715 * h ** 3)))
    return x + h @ p["w_mlpproj"] + p["b_mlpproj"]


# ----------------------------------------------------------------------------
# Main
# ----------------------------------------------------------------------------
if __name__ == "__main__":
    # Small config consistent with the module (E divisible by n_head).
    # E=128 keeps the last dim lane-dense; q_tile=8 with S=16 exercises the
    # multi-tile flash path (2 q tiles x 2 kv tiles, causal skip on (0,1)).
    B, S, E, H = 2, 16, 128, 4
    n_layer = 12  # only used for NANOGPT_SCALE_INIT std scaling

    key = jax.random.PRNGKey(0)
    ks = jax.random.split(key, 14)

    std = 0.02
    std_proj = 0.02 * (2 * n_layer) ** -0.5   # c_proj has NANOGPT_SCALE_INIT

    params = {
        "ln1_g": 1.0 + 0.1 * jax.random.normal(ks[0], (1, E), jnp.float32),
        "ln1_b": 0.1 * jax.random.normal(ks[1], (1, E), jnp.float32),
        # nn.Linear(E, 3E): weight (3E, E) -> stored transposed (E, 3E)
        "w_qkv": std * jax.random.normal(ks[2], (E, 3 * E), jnp.float32),
        "b_qkv": 0.02 * jax.random.normal(ks[3], (1, 3 * E), jnp.float32),
        "w_attnproj": std_proj * jax.random.normal(ks[4], (E, E), jnp.float32),
        "b_attnproj": 0.02 * jax.random.normal(ks[5], (1, E), jnp.float32),
        "ln2_g": 1.0 + 0.1 * jax.random.normal(ks[6], (1, E), jnp.float32),
        "ln2_b": 0.1 * jax.random.normal(ks[7], (1, E), jnp.float32),
        "w_fc": std * jax.random.normal(ks[8], (E, 4 * E), jnp.float32),
        "b_fc": 0.02 * jax.random.normal(ks[9], (1, 4 * E), jnp.float32),
        "w_mlpproj": std * jax.random.normal(ks[10], (4 * E, E), jnp.float32),
        "b_mlpproj": 0.02 * jax.random.normal(ks[11], (1, E), jnp.float32),
    }

    x = jax.random.normal(ks[12], (B, S, E), jnp.float32)

    out = gpt2_block(x, params, n_head=H, q_tile=8)
    out = jax.block_until_ready(out)

    ref = gpt2_block_ref(x, params, n_head=H)
    assert out.shape == (B, S, E)
    max_err = float(jnp.max(jnp.abs(out - ref)))
    # bf16 MXU operands (fp32 accumulation) -> loosened tolerance vs fp32 ref.
    assert jnp.allclose(out, ref, atol=2e-2, rtol=2e-2), f"mismatch: {max_err}"

    print("KERNEL_OK")
</pallas_src>

<mosaic_0001>
module attributes {stable_mosaic.version = 11 : i64} {
  func.func @_qkv_kernel(%arg0: i32, %arg1: i32, %arg2: memref<1x8x128xf32, #tpu.memory_space<vmem>>, %arg3: memref<1x128xf32, #tpu.memory_space<vmem>>, %arg4: memref<1x128xf32, #tpu.memory_space<vmem>>, %arg5: memref<128x384xbf16, #tpu.memory_space<vmem>>, %arg6: memref<1x384xf32, #tpu.memory_space<vmem>>, %arg7: memref<1x8x128xbf16, #tpu.memory_space<vmem>>, %arg8: memref<1x8x128xbf16, #tpu.memory_space<vmem>>, %arg9: memref<1x8x128xbf16, #tpu.memory_space<vmem>>) attributes {dimension_semantics = [#tpu.dimension_semantics<parallel>, #tpu.dimension_semantics<parallel>], iteration_bounds = array<i64: 2, 2>, scalar_prefetch = 0 : i64, scratch_operands = 0 : i64, tpu.core_type = #tpu.core_type<tc>, window_params = [{transform_indices = @transform_0, window_bounds = array<i64: 1, 8, 128>}, {pipeline_mode = #tpu.pipeline_mode<synchronous>, transform_indices = @transform_1, window_bounds = array<i64: 1, 128>}, {pipeline_mode = #tpu.pipeline_mode<synchronous>, transform_indices = @transform_2, window_bounds = array<i64: 1, 128>}, {pipeline_mode = #tpu.pipeline_mode<synchronous>, transform_indices = @transform_3, window_bounds = array<i64: 128, 384>}, {pipeline_mode = #tpu.pipeline_mode<synchronous>, transform_indices = @transform_4, window_bounds = array<i64: 1, 384>}, {transform_indices = @transform_5, window_bounds = array<i64: 1, 8, 128>}, {transform_indices = @transform_6, window_bounds = array<i64: 1, 8, 128>}, {transform_indices = @transform_7, window_bounds = array<i64: 1, 8, 128>}]} {
    %c0 = arith.constant 0 : index
    %c0_0 = arith.constant 0 : index
    %c0_1 = arith.constant 0 : index
    %0 = vector.load %arg2[%c0, %c0_0, %c0_1] : memref<1x8x128xf32, #tpu.memory_space<vmem>>, vector<1x8x128xf32>
    %1 = vector.shape_cast %0 : vector<1x8x128xf32> to vector<8x128xf32>
    %c0_2 = arith.constant 0 : index
    %c0_3 = arith.constant 0 : index
    %2 = vector.load %arg3[%c0_2, %c0_3] : memref<1x128xf32, #tpu.memory_space<vmem>>, vector<1x128xf32>
    %c0_4 = arith.constant 0 : index
    %c0_5 = arith.constant 0 : index
    %3 = vector.load %arg4[%c0_4, %c0_5] : memref<1x128xf32, #tpu.memory_space<vmem>>, vector<1x128xf32>
    %cst = arith.constant dense<0.000000e+00> : vector<8xf32>
    %4 = vector.multi_reduction <add>, %1, %cst [1] : vector<8x128xf32> to vector<8xf32>
    %5 = vector.shape_cast %4 : vector<8xf32> to vector<8x1xf32>
    %cst_6 = arith.constant 1.280000e+02 : f32
    %6 = vector.broadcast %cst_6 : f32 to vector<8x1xf32>
    %7 = arith.divf %5, %6 : vector<8x1xf32>
    %8 = vector.broadcast %7 : vector<8x1xf32> to vector<8x128xf32>
    %9 = arith.subf %1, %8 : vector<8x128xf32>
    %10 = arith.mulf %9, %9 : vector<8x128xf32>
    %cst_7 = arith.constant dense<0.000000e+00> : vector<8xf32>
    %11 = vector.multi_reduction <add>, %10, %cst_7 [1] : vector<8x128xf32> to vector<8xf32>
    %12 = vector.shape_cast %11 : vector<8xf32> to vector<8x1xf32>
    %cst_8 = arith.constant 1.280000e+02 : f32
    %13 = vector.broadcast %cst_8 : f32 to vector<8x1xf32>
    %14 = arith.divf %12, %13 : vector<8x1xf32>
    %15 = vector.broadcast %7 : vector<8x1xf32> to vector<8x128xf32>
    %16 = arith.subf %1, %15 : vector<8x128xf32>
    %cst_9 = arith.constant 9.99999974E-6 : f32
    %17 = vector.broadcast %cst_9 : f32 to vector<8x1xf32>
    %18 = arith.addf %14, %17 : vector<8x1xf32>
    %19 = math.rsqrt %18 : vector<8x1xf32>
    %20 = vector.broadcast %19 : vector<8x1xf32> to vector<8x128xf32>
    %21 = arith.mulf %16, %20 : vector<8x128xf32>
    %22 = vector.broadcast %2 : vector<1x128xf32> to vector<8x128xf32>
    %23 = arith.mulf %21, %22 : vector<8x128xf32>
    %24 = vector.broadcast %3 : vector<1x128xf32> to vector<8x128xf32>
    %25 = arith.addf %23, %24 : vector<8x128xf32>
    %26 = arith.truncf %25 : vector<8x128xf32> to vector<8x128xbf16>
    %c0_10 = arith.constant 0 : index
    %c0_11 = arith.constant 0 : index
    %27 = vector.load %arg5[%c0_10, %c0_11] : memref<128x384xbf16, #tpu.memory_space<vmem>>, vector<128x384xbf16>
    %cst_12 = arith.constant dense<0.000000e+00> : vector<8x384xf32>
    %28 = tpu.matmul %26, %27, %cst_12 {dimension_numbers = #tpu.dot_dimension_numbers<[1], [0], [0], [1], [0, 0, 1, 1], [], []>} : vector<8x128xbf16>, vector<128x384xbf16>, vector<8x384xf32> -> vector<8x384xf32>
    %c0_13 = arith.constant 0 : index
    %c0_14 = arith.constant 0 : index
    %29 = vector.load %arg6[%c0_13, %c0_14] : memref<1x384xf32, #tpu.memory_space<vmem>>, vector<1x384xf32>
    %30 = vector.broadcast %29 : vector<1x384xf32> to vector<8x384xf32>
    %31 = arith.addf %28, %30 : vector<8x384xf32>
    %32 = vector.extract_strided_slice %31 {offsets = [0, 0], sizes = [8, 128], strides = [1, 1]} : vector<8x384xf32> to vector<8x128xf32>
    %33 = arith.truncf %32 : vector<8x128xf32> to vector<8x128xbf16>
    %c0_15 = arith.constant 0 : index
    %c0_16 = arith.constant 0 : index
    %c0_17 = arith.constant 0 : index
    %34 = vector.load %arg7[%c0_15, %c0_16, %c0_17] : memref<1x8x128xbf16, #tpu.memory_space<vmem>>, vector<1x8x128xbf16>
    %35 = vector.shape_cast %34 : vector<1x8x128xbf16> to vector<8x128xbf16>
    %36 = vector.shape_cast %33 : vector<8x128xbf16> to vector<1x8x128xbf16>
    tpu.vector_store %arg7[%c0_15, %c0_16, %c0_17], %36 {strides = array<i32>} : memref<1x8x128xbf16, #tpu.memory_space<vmem>>, vector<1x8x128xbf16>,
    %37 = vector.extract_strided_slice %31 {offsets = [0, 128], sizes = [8, 128], strides = [1, 1]} : vector<8x384xf32> to vector<8x128xf32>
    %38 = arith.truncf %37 : vector<8x128xf32> to vector<8x128xbf16>
    %c0_18 = arith.constant 0 : index
    %c0_19 = arith.constant 0 : index
    %c0_20 = arith.constant 0 : index
    %39 = vector.load %arg8[%c0_18, %c0_19, %c0_20] : memref<1x8x128xbf16, #tpu.memory_space<vmem>>, vector<1x8x128xbf16>
    %40 = vector.shape_cast %39 : vector<1x8x128xbf16> to vector<8x128xbf16>
    %41 = vector.shape_cast %38 : vector<8x128xbf16> to vector<1x8x128xbf16>
    tpu.vector_store %arg8[%c0_18, %c0_19, %c0_20], %41 {strides = array<i32>} : memref<1x8x128xbf16, #tpu.memory_space<vmem>>, vector<1x8x128xbf16>,
    %42 = vector.extract_strided_slice %31 {offsets = [0, 256], sizes = [8, 128], strides = [1, 1]} : vector<8x384xf32> to vector<8x128xf32>
    %43 = arith.truncf %42 : vector<8x128xf32> to vector<8x128xbf16>
    %c0_21 = arith.constant 0 : index
    %c0_22 = arith.constant 0 : index
    %c0_23 = arith.constant 0 : index
    %44 = vector.load %arg9[%c0_21, %c0_22, %c0_23] : memref<1x8x128xbf16, #tpu.memory_space<vmem>>, vector<1x8x128xbf16>
    %45 = vector.shape_cast %44 : vector<1x8x128xbf16> to vector<8x128xbf16>
    %46 = vector.shape_cast %43 : vector<8x128xbf16> to vector<1x8x128xbf16>
    tpu.vector_store %arg9[%c0_21, %c0_22, %c0_23], %46 {strides = array<i32>} : memref<1x8x128xbf16, #tpu.memory_space<vmem>>, vector<1x8x128xbf16>,
    return
  }
  func.func @transform_0(%arg0: i32, %arg1: i32) -> (i32, i32, i32) {
    %c0_i32 = arith.constant 0 : i32
    %c0_i32_0 = arith.constant 0 : i32
    return %arg0, %arg1, %c0_i32 : i32, i32, i32
  }
  func.func @transform_1(%arg0: i32, %arg1: i32) -> (i32, i32) {
    %c0_i32 = arith.constant 0 : i32
    %c0_i32_0 = arith.constant 0 : i32
    %c0_i32_1 = arith.constant 0 : i32
    return %c0_i32, %c0_i32_0 : i32, i32
  }
  func.func @transform_2(%arg0: i32, %arg1: i32) -> (i32, i32) {
    %c0_i32 = arith.constant 0 : i32
    %c0_i32_0 = arith.constant 0 : i32
    %c0_i32_1 = arith.constant 0 : i32
    return %c0_i32, %c0_i32_0 : i32, i32
  }
  func.func @transform_3(%arg0: i32, %arg1: i32) -> (i32, i32) {
    %c0_i32 = arith.constant 0 : i32
    %c0_i32_0 = arith.constant 0 : i32
    %c0_i32_1 = arith.constant 0 : i32
    return %c0_i32, %c0_i32_0 : i32, i32
  }
  func.func @transform_4(%arg0: i32, %arg1: i32) -> (i32, i32) {
    %c0_i32 = arith.constant 0 : i32
    %c0_i32_0 = arith.constant 0 : i32
    %c0_i32_1 = arith.constant 0 : i32
    return %c0_i32, %c0_i32_0 : i32, i32
  }
  func.func @transform_5(%arg0: i32, %arg1: i32) -> (i32, i32, i32) {
    %c0_i32 = arith.constant 0 : i32
    %c0_i32_0 = arith.constant 0 : i32
    return %arg0, %arg1, %c0_i32 : i32, i32, i32
  }
  func.func @transform_6(%arg0: i32, %arg1: i32) -> (i32, i32, i32) {
    %c0_i32 = arith.constant 0 : i32
    %c0_i32_0 = arith.constant 0 : i32
    return %arg0, %arg1, %c0_i32 : i32, i32, i32
  }
  func.func @transform_7(%arg0: i32, %arg1: i32) -> (i32, i32, i32) {
    %c0_i32 = arith.constant 0 : i32
    %c0_i32_0 = arith.constant 0 : i32
    return %arg0, %arg1, %c0_i32 : i32, i32, i32
  }
}

module attributes {stable_mosaic.version = 11 : i64} {
  func.func @_flash_attn_kernel(%arg0: i32, %arg1: i32, %arg2: i32, %arg3: i32, %arg4: memref<1x1x8x32xbf16, #tpu.memory_space<vmem>>, %arg5: memref<1x1x8x32xbf16, #tpu.memory_space<vmem>>, %arg6: memref<1x1x8x32xbf16, #tpu.memory_space<vmem>>, %arg7: memref<1x1x8x32xbf16, #tpu.memory_space<vmem>>, %arg8: memref<8x1xf32, #tpu.memory_space<vmem>>, %arg9: memref<8x1xf32, #tpu.memory_space<vmem>>, %arg10: memref<8x32xf32, #tpu.memory_space<vmem>>) attributes {dimension_semantics = [#tpu.dimension_semantics<parallel>, #tpu.dimension_semantics<parallel>, #tpu.dimension_semantics<parallel>, #tpu.dimension_semantics<arbitrary>], iteration_bounds = array<i64: 2, 4, 2, 2>, scalar_prefetch = 0 : i64, scratch_operands = 3 : i64, tpu.core_type = #tpu.core_type<tc>, window_params = [{transform_indices = @transform_0, window_bounds = array<i64: 1, 1, 8, 32>}, {transform_indices = @transform_1, window_bounds = array<i64: 1, 1, 8, 32>}, {transform_indices = @transform_2, window_bounds = array<i64: 1, 1, 8, 32>}, {transform_indices = @transform_3, window_bounds = array<i64: 1, 1, 8, 32>}]} {
    %c0_i32 = arith.constant 0 : i32
    %0 = arith.cmpi eq, %arg3, %c0_i32 : i32
    %1 = arith.extui %0 : i1 to i32
    %c0_i32_0 = arith.constant 0 : i32
    %2 = arith.cmpi ne, %1, %c0_i32_0 : i32
    scf.if %2 {
      %cst = arith.constant 0xFF800000 : f32
      %9 = vector.broadcast %cst : f32 to vector<8x1xf32>
      %c0 = arith.constant 0 : index
      %c0_3 = arith.constant 0 : index
      %10 = vector.load %arg8[%c0, %c0_3] : memref<8x1xf32, #tpu.memory_space<vmem>>, vector<8x1xf32>
      tpu.vector_store %arg8[%c0, %c0_3], %9 {strides = array<i32>} : memref<8x1xf32, #tpu.memory_space<vmem>>, vector<8x1xf32>,
      %cst_4 = arith.constant 0.000000e+00 : f32
      %11 = vector.broadcast %cst_4 : f32 to vector<8x1xf32>
      %c0_5 = arith.constant 0 : index
      %c0_6 = arith.constant 0 : index
      %12 = vector.load %arg9[%c0_5, %c0_6] : memref<8x1xf32, #tpu.memory_space<vmem>>, vector<8x1xf32>
      tpu.vector_store %arg9[%c0_5, %c0_6], %11 {strides = array<i32>} : memref<8x1xf32, #tpu.memory_space<vmem>>, vector<8x1xf32>,
      %cst_7 = arith.constant 0.000000e+00 : f32
      %13 = vector.broadcast %cst_7 : f32 to vector<8x32xf32>
      %c0_8 = arith.constant 0 : index
      %c0_9 = arith.constant 0 : index
      %14 = vector.load %arg10[%c0_8, %c0_9] : memref<8x32xf32, #tpu.memory_space<vmem>>, vector<8x32xf32>
      tpu.vector_store %arg10[%c0_8, %c0_9], %13 {strides = array<i32>} : memref<8x32xf32, #tpu.memory_space<vmem>>, vector<8x32xf32>,
    } else {
    }
    %3 = arith.cmpi sle, %arg3, %arg2 : i32
    %4 = arith.extui %3 : i1 to i32
    %c0_i32_1 = arith.constant 0 : i32
    %5 = arith.cmpi ne, %4, %c0_i32_1 : i32
    scf.if %5 {
      %c0 = arith.constant 0 : index
      %c0_3 = arith.constant 0 : index
      %c0_4 = arith.constant 0 : index
      %c0_5 = arith.constant 0 : index
      %9 = vector.load %arg4[%c0, %c0_3, %c0_4, %c0_5] : memref<1x1x8x32xbf16, #tpu.memory_space<vmem>>, vector<1x1x8x32xbf16>
      %10 = vector.shape_cast %9 : vector<1x1x8x32xbf16> to vector<8x32xbf16>
      %c0_6 = arith.constant 0 : index
      %c0_7 = arith.constant 0 : index
      %c0_8 = arith.constant 0 : index
      %c0_9 = arith.constant 0 : index
      %11 = vector.load %arg5[%c0_6, %c0_7, %c0_8, %c0_9] : memref<1x1x8x32xbf16, #tpu.memory_space<vmem>>, vector<1x1x8x32xbf16>
      %12 = vector.shape_cast %11 : vector<1x1x8x32xbf16> to vector<8x32xbf16>
      %c0_10 = arith.constant 0 : index
      %c0_11 = arith.constant 0 : index
      %c0_12 = arith.constant 0 : index
      %c0_13 = arith.constant 0 : index
      %13 = vector.load %arg6[%c0_10, %c0_11, %c0_12, %c0_13] : memref<1x1x8x32xbf16, #tpu.memory_space<vmem>>, vector<1x1x8x32xbf16>
      %14 = vector.shape_cast %13 : vector<1x1x8x32xbf16> to vector<8x32xbf16>
      %cst = arith.constant dense<0.000000e+00> : vector<8x8xf32>
      %15 = tpu.matmul %10, %12, %cst {dimension_numbers = #tpu.dot_dimension_numbers<[1], [1], [0], [0], [0, 0, 1, 0], [], []>} : vector<8x32xbf16>, vector<8x32xbf16>, vector<8x8xf32> -> vector<8x8xf32>
      %cst_14 = arith.constant 0.176776692 : f32
      %16 = vector.broadcast %cst_14 : f32 to vector<8x8xf32>
      %17 = arith.mulf %15, %16 : vector<8x8xf32>
      %c8_i32 = arith.constant 8 : i32
      %18 = arith.muli %arg2, %c8_i32 : i32
      %19 = tpu.iota {dimensions = array<i32: 0>} : vector<8x8xi32>
      %20 = vector.broadcast %18 : i32 to vector<8x8xi32>
      %21 = arith.addi %20, %19 : vector<8x8xi32>
      %c8_i32_15 = arith.constant 8 : i32
      %22 = arith.muli %arg3, %c8_i32_15 : i32
      %23 = tpu.iota {dimensions = array<i32: 1>} : vector<8x8xi32>
      %24 = vector.broadcast %22 : i32 to vector<8x8xi32>
      %25 = arith.addi %24, %23 : vector<8x8xi32>
      %26 = arith.cmpi sge, %21, %25 : vector<8x8xi32>
      %cst_16 = arith.constant -1.000000e+30 : f32
      %27 = vector.broadcast %cst_16 : f32 to vector<8x8xf32>
      %28 = arith.select %26, %17, %27 : vector<8x8xi1>, vector<8x8xf32>
      %c0_17 = arith.constant 0 : index
      %c0_18 = arith.constant 0 : index
      %29 = vector.load %arg8[%c0_17, %c0_18] : memref<8x1xf32, #tpu.memory_space<vmem>>, vector<8x1xf32>
      %cst_19 = arith.constant dense<0xFF800000> : vector<8xf32>
      %30 = vector.multi_reduction <maximumf>, %28, %cst_19 [1] : vector<8x8xf32> to vector<8xf32>
      %31 = vector.shape_cast %30 : vector<8xf32> to vector<8x1xf32>
      %32 = arith.maximumf %29, %31 : vector<8x1xf32>
      %33 = arith.subf %29, %32 : vector<8x1xf32>
      %34 = math.exp %33 : vector<8x1xf32>
      %35 = vector.broadcast %32 : vector<8x1xf32> to vector<8x8xf32>
      %36 = arith.subf %28, %35 : vector<8x8xf32>
      %37 = math.exp %36 : vector<8x8xf32>
      %c0_20 = arith.constant 0 : index
      %c0_21 = arith.constant 0 : index
      %38 = vector.load %arg9[%c0_20, %c0_21] : memref<8x1xf32, #tpu.memory_space<vmem>>, vector<8x1xf32>
      %39 = arith.mulf %34, %38 : vector<8x1xf32>
      %cst_22 = arith.constant dense<0.000000e+00> : vector<8xf32>
      %40 = vector.multi_reduction <add>, %37, %cst_22 [1] : vector<8x8xf32> to vector<8xf32>
      %41 = vector.shape_cast %40 : vector<8xf32> to vector<8x1xf32>
      %42 = arith.addf %39, %41 : vector<8x1xf32>
      %c0_23 = arith.constant 0 : index
      %c0_24 = arith.constant 0 : index
      %43 = vector.load %arg9[%c0_23, %c0_24] : memref<8x1xf32, #tpu.memory_space<vmem>>, vector<8x1xf32>
      tpu.vector_store %arg9[%c0_23, %c0_24], %42 {strides = array<i32>} : memref<8x1xf32, #tpu.memory_space<vmem>>, vector<8x1xf32>,
      %c0_25 = arith.constant 0 : index
      %c0_26 = arith.constant 0 : index
      %44 = vector.load %arg10[%c0_25, %c0_26] : memref<8x32xf32, #tpu.memory_space<vmem>>, vector<8x32xf32>
      %45 = vector.broadcast %34 : vector<8x1xf32> to vector<8x32xf32>
      %46 = arith.mulf %45, %44 : vector<8x32xf32>
      %47 = arith.truncf %37 : vector<8x8xf32> to vector<8x8xbf16>
      %cst_27 = arith.constant dense<0.000000e+00> : vector<8x32xf32>
      %48 = tpu.matmul %47, %14, %cst_27 {dimension_numbers = #tpu.dot_dimension_numbers<[1], [0], [0], [1], [0, 0, 1, 1], [], []>} : vector<8x8xbf16>, vector<8x32xbf16>, vector<8x32xf32> -> vector<8x32xf32>
      %49 = arith.addf %46, %48 : vector<8x32xf32>
      %c0_28 = arith.constant 0 : index
      %c0_29 = arith.constant 0 : index
      %50 = vector.load %arg10[%c0_28, %c0_29] : memref<8x32xf32, #tpu.memory_space<vmem>>, vector<8x32xf32>
      tpu.vector_store %arg10[%c0_28, %c0_29], %49 {strides = array<i32>} : memref<8x32xf32, #tpu.memory_space<vmem>>, vector<8x32xf32>,
      %c0_30 = arith.constant 0 : index
      %c0_31 = arith.constant 0 : index
      %51 = vector.load %arg8[%c0_30, %c0_31] : memref<8x1xf32, #tpu.memory_space<vmem>>, vector<8x1xf32>
      tpu.vector_store %arg8[%c0_30, %c0_31], %32 {strides = array<i32>} : memref<8x1xf32, #tpu.memory_space<vmem>>, vector<8x1xf32>,
    } else {
    }
    %c1_i32 = arith.constant 1 : i32
    %6 = arith.cmpi eq, %arg3, %c1_i32 : i32
    %7 = arith.extui %6 : i1 to i32
    %c0_i32_2 = arith.constant 0 : i32
    %8 = arith.cmpi ne, %7, %c0_i32_2 : i32
    scf.if %8 {
      %c0 = arith.constant 0 : index
      %c0_3 = arith.constant 0 : index
      %9 = vector.load %arg9[%c0, %c0_3] : memref<8x1xf32, #tpu.memory_space<vmem>>, vector<8x1xf32>
      %10 = tpu.reciprocal %9 {approx = true} : vector<8x1xf32> -> vector<8x1xf32>
      %c0_4 = arith.constant 0 : index
      %c0_5 = arith.constant 0 : index
      %11 = vector.load %arg10[%c0_4, %c0_5] : memref<8x32xf32, #tpu.memory_space<vmem>>, vector<8x32xf32>
      %12 = vector.broadcast %10 : vector<8x1xf32> to vector<8x32xf32>
      %13 = arith.mulf %11, %12 : vector<8x32xf32>
      %14 = arith.truncf %13 : vector<8x32xf32> to vector<8x32xbf16>
      %c0_6 = arith.constant 0 : index
      %c0_7 = arith.constant 0 : index
      %c0_8 = arith.constant 0 : index
      %c0_9 = arith.constant 0 : index
      %15 = vector.load %arg7[%c0_6, %c0_7, %c0_8, %c0_9] : memref<1x1x8x32xbf16, #tpu.memory_space<vmem>>, vector<1x1x8x32xbf16>
      %16 = vector.shape_cast %15 : vector<1x1x8x32xbf16> to vector<8x32xbf16>
      %17 = vector.shape_cast %14 : vector<8x32xbf16> to vector<1x1x8x32xbf16>
      tpu.vector_store %arg7[%c0_6, %c0_7, %c0_8, %c0_9], %17 {strides = array<i32>} : memref<1x1x8x32xbf16, #tpu.memory_space<vmem>>, vector<1x1x8x32xbf16>,
    } else {
    }
    return
  }
  func.func @transform_0(%arg0: i32, %arg1: i32, %arg2: i32, %arg3: i32) -> (i32, i32, i32, i32) {
    %c0_i32 = arith.constant 0 : i32
    %c0_i32_0 = arith.constant 0 : i32
    return %arg0, %arg1, %arg2, %c0_i32 : i32, i32, i32, i32
  }
  func.func @transform_1(%arg0: i32, %arg1: i32, %arg2: i32, %arg3: i32) -> (i32, i32, i32, i32) {
    %0 = arith.minsi %arg3, %arg2 : i32
    %c0_i32 = arith.constant 0 : i32
    %c0_i32_0 = arith.constant 0 : i32
    return %arg0, %arg1, %0, %c0_i32 : i32, i32, i32, i32
  }
  func.func @transform_2(%arg0: i32, %arg1: i32, %arg2: i32, %arg3: i32) -> (i32, i32, i32, i32) {
    %0 = arith.minsi %arg3, %arg2 : i32
    %c0_i32 = arith.constant 0 : i32
    %c0_i32_0 = arith.constant 0 : i32
    return %arg0, %arg1, %0, %c0_i32 : i32, i32, i32, i32
  }
  func.func @transform_3(%arg0: i32, %arg1: i32, %arg2: i32, %arg3: i32) -> (i32, i32, i32, i32) {
    %c0_i32 = arith.constant 0 : i32
    %c0_i32_0 = arith.constant 0 : i32
    return %arg0, %arg1, %arg2, %c0_i32 : i32, i32, i32, i32
  }
}

module attributes {stable_mosaic.version = 11 : i64} {
  func.func @_proj_mlp_kernel(%arg0: i32, %arg1: i32, %arg2: memref<1x8x128xf32, #tpu.memory_space<vmem>>, %arg3: memref<1x8x128xbf16, #tpu.memory_space<vmem>>, %arg4: memref<128x128xbf16, #tpu.memory_space<vmem>>, %arg5: memref<1x128xf32, #tpu.memory_space<vmem>>, %arg6: memref<1x128xf32, #tpu.memory_space<vmem>>, %arg7: memref<1x128xf32, #tpu.memory_space<vmem>>, %arg8: memref<128x512xbf16, #tpu.memory_space<vmem>>, %arg9: memref<1x512xf32, #tpu.memory_space<vmem>>, %arg10: memref<512x128xbf16, #tpu.memory_space<vmem>>, %arg11: memref<1x128xf32, #tpu.memory_space<vmem>>, %arg12: memref<1x8x128xf32, #tpu.memory_space<vmem>>) attributes {dimension_semantics = [#tpu.dimension_semantics<parallel>, #tpu.dimension_semantics<parallel>], iteration_bounds = array<i64: 2, 2>, scalar_prefetch = 0 : i64, scratch_operands = 0 : i64, tpu.core_type = #tpu.core_type<tc>, window_params = [{transform_indices = @transform_0, window_bounds = array<i64: 1, 8, 128>}, {transform_indices = @transform_1, window_bounds = array<i64: 1, 8, 128>}, {pipeline_mode = #tpu.pipeline_mode<synchronous>, transform_indices = @transform_2, window_bounds = array<i64: 128, 128>}, {pipeline_mode = #tpu.pipeline_mode<synchronous>, transform_indices = @transform_3, window_bounds = array<i64: 1, 128>}, {pipeline_mode = #tpu.pipeline_mode<synchronous>, transform_indices = @transform_4, window_bounds = array<i64: 1, 128>}, {pipeline_mode = #tpu.pipeline_mode<synchronous>, transform_indices = @transform_5, window_bounds = array<i64: 1, 128>}, {pipeline_mode = #tpu.pipeline_mode<synchronous>, transform_indices = @transform_6, window_bounds = array<i64: 128, 512>}, {pipeline_mode = #tpu.pipeline_mode<synchronous>, transform_indices = @transform_7, window_bounds = array<i64: 1, 512>}, {pipeline_mode = #tpu.pipeline_mode<synchronous>, transform_indices = @transform_8, window_bounds = array<i64: 512, 128>}, {pipeline_mode = #tpu.pipeline_mode<synchronous>, transform_indices = @transform_9, window_bounds = array<i64: 1, 128>}, {transform_indices = @transform_10, window_bounds = array<i64: 1, 8, 128>}]} {
    %c0 = arith.constant 0 : index
    %c0_0 = arith.constant 0 : index
    %c0_1 = arith.constant 0 : index
    %0 = vector.load %arg2[%c0, %c0_0, %c0_1] : memref<1x8x128xf32, #tpu.memory_space<vmem>>, vector<1x8x128xf32>
    %1 = vector.shape_cast %0 : vector<1x8x128xf32> to vector<8x128xf32>
    %c0_2 = arith.constant 0 : index
    %c0_3 = arith.constant 0 : index
    %c0_4 = arith.constant 0 : index
    %2 = vector.load %arg3[%c0_2, %c0_3, %c0_4] : memref<1x8x128xbf16, #tpu.memory_space<vmem>>, vector<1x8x128xbf16>
    %3 = vector.shape_cast %2 : vector<1x8x128xbf16> to vector<8x128xbf16>
    %c0_5 = arith.constant 0 : index
    %c0_6 = arith.constant 0 : index
    %4 = vector.load %arg4[%c0_5, %c0_6] : memref<128x128xbf16, #tpu.memory_space<vmem>>, vector<128x128xbf16>
    %cst = arith.constant dense<0.000000e+00> : vector<8x128xf32>
    %5 = tpu.matmul %3, %4, %cst {dimension_numbers = #tpu.dot_dimension_numbers<[1], [0], [0], [1], [0, 0, 1, 1], [], []>} : vector<8x128xbf16>, vector<128x128xbf16>, vector<8x128xf32> -> vector<8x128xf32>
    %6 = arith.addf %1, %5 : vector<8x128xf32>
    %c0_7 = arith.constant 0 : index
    %c0_8 = arith.constant 0 : index
    %7 = vector.load %arg5[%c0_7, %c0_8] : memref<1x128xf32, #tpu.memory_space<vmem>>, vector<1x128xf32>
    %8 = vector.broadcast %7 : vector<1x128xf32> to vector<8x128xf32>
    %9 = arith.addf %6, %8 : vector<8x128xf32>
    %c0_9 = arith.constant 0 : index
    %c0_10 = arith.constant 0 : index
    %10 = vector.load %arg6[%c0_9, %c0_10] : memref<1x128xf32, #tpu.memory_space<vmem>>, vector<1x128xf32>
    %c0_11 = arith.constant 0 : index
    %c0_12 = arith.constant 0 : index
    %11 = vector.load %arg7[%c0_11, %c0_12] : memref<1x128xf32, #tpu.memory_space<vmem>>, vector<1x128xf32>
    %cst_13 = arith.constant dense<0.000000e+00> : vector<8xf32>
    %12 = vector.multi_reduction <add>, %9, %cst_13 [1] : vector<8x128xf32> to vector<8xf32>
    %13 = vector.shape_cast %12 : vector<8xf32> to vector<8x1xf32>
    %cst_14 = arith.constant 1.280000e+02 : f32
    %14 = vector.broadcast %cst_14 : f32 to vector<8x1xf32>
    %15 = arith.divf %13, %14 : vector<8x1xf32>
    %16 = vector.broadcast %15 : vector<8x1xf32> to vector<8x128xf32>
    %17 = arith.subf %9, %16 : vector<8x128xf32>
    %18 = arith.mulf %17, %17 : vector<8x128xf32>
    %cst_15 = arith.constant dense<0.000000e+00> : vector<8xf32>
    %19 = vector.multi_reduction <add>, %18, %cst_15 [1] : vector<8x128xf32> to vector<8xf32>
    %20 = vector.shape_cast %19 : vector<8xf32> to vector<8x1xf32>
    %cst_16 = arith.constant 1.280000e+02 : f32
    %21 = vector.broadcast %cst_16 : f32 to vector<8x1xf32>
    %22 = arith.divf %20, %21 : vector<8x1xf32>
    %23 = vector.broadcast %15 : vector<8x1xf32> to vector<8x128xf32>
    %24 = arith.subf %9, %23 : vector<8x128xf32>
    %cst_17 = arith.constant 9.99999974E-6 : f32
    %25 = vector.broadcast %cst_17 : f32 to vector<8x1xf32>
    %26 = arith.addf %22, %25 : vector<8x1xf32>
    %27 = math.rsqrt %26 : vector<8x1xf32>
    %28 = vector.broadcast %27 : vector<8x1xf32> to vector<8x128xf32>
    %29 = arith.mulf %24, %28 : vector<8x128xf32>
    %30 = vector.broadcast %10 : vector<1x128xf32> to vector<8x128xf32>
    %31 = arith.mulf %29, %30 : vector<8x128xf32>
    %32 = vector.broadcast %11 : vector<1x128xf32> to vector<8x128xf32>
    %33 = arith.addf %31, %32 : vector<8x128xf32>
    %34 = arith.truncf %33 : vector<8x128xf32> to vector<8x128xbf16>
    %c0_18 = arith.constant 0 : index
    %c0_19 = arith.constant 0 : index
    %35 = vector.load %arg8[%c0_18, %c0_19] : memref<128x512xbf16, #tpu.memory_space<vmem>>, vector<128x512xbf16>
    %cst_20 = arith.constant dense<0.000000e+00> : vector<8x512xf32>
    %36 = tpu.matmul %34, %35, %cst_20 {dimension_numbers = #tpu.dot_dimension_numbers<[1], [0], [0], [1], [0, 0, 1, 1], [], []>} : vector<8x128xbf16>, vector<128x512xbf16>, vector<8x512xf32> -> vector<8x512xf32>
    %c0_21 = arith.constant 0 : index
    %c0_22 = arith.constant 0 : index
    %37 = vector.load %arg9[%c0_21, %c0_22] : memref<1x512xf32, #tpu.memory_space<vmem>>, vector<1x512xf32>
    %38 = vector.broadcast %37 : vector<1x512xf32> to vector<8x512xf32>
    %39 = arith.addf %36, %38 : vector<8x512xf32>
    %cst_23 = arith.constant 5.000000e-01 : f32
    %40 = vector.broadcast %cst_23 : f32 to vector<8x512xf32>
    %41 = arith.mulf %40, %39 : vector<8x512xf32>
    %cst_24 = arith.constant 4.471500e-02 : f32
    %42 = vector.broadcast %cst_24 : f32 to vector<8x512xf32>
    %43 = arith.mulf %42, %39 : vector<8x512xf32>
    %44 = arith.mulf %43, %39 : vector<8x512xf32>
    %45 = arith.mulf %44, %39 : vector<8x512xf32>
    %46 = arith.addf %39, %45 : vector<8x512xf32>
    %cst_25 = arith.constant 0.797884583 : f32
    %47 = vector.broadcast %cst_25 : f32 to vector<8x512xf32>
    %48 = arith.mulf %47, %46 : vector<8x512xf32>
    %49 = math.tanh %48 : vector<8x512xf32>
    %cst_26 = arith.constant 1.000000e+00 : f32
    %50 = vector.broadcast %cst_26 : f32 to vector<8x512xf32>
    %51 = arith.addf %50, %49 : vector<8x512xf32>
    %52 = arith.mulf %41, %51 : vector<8x512xf32>
    %53 = arith.truncf %52 : vector<8x512xf32> to vector<8x512xbf16>
    %c0_27 = arith.constant 0 : index
    %c0_28 = arith.constant 0 : index
    %54 = vector.load %arg10[%c0_27, %c0_28] : memref<512x128xbf16, #tpu.memory_space<vmem>>, vector<512x128xbf16>
    %cst_29 = arith.constant dense<0.000000e+00> : vector<8x128xf32>
    %55 = tpu.matmul %53, %54, %cst_29 {dimension_numbers = #tpu.dot_dimension_numbers<[1], [0], [0], [1], [0, 0, 1, 1], [], []>} : vector<8x512xbf16>, vector<512x128xbf16>, vector<8x128xf32> -> vector<8x128xf32>
    %c0_30 = arith.constant 0 : index
    %c0_31 = arith.constant 0 : index
    %56 = vector.load %arg11[%c0_30, %c0_31] : memref<1x128xf32, #tpu.memory_space<vmem>>, vector<1x128xf32>
    %57 = vector.broadcast %56 : vector<1x128xf32> to vector<8x128xf32>
    %58 = arith.addf %55, %57 : vector<8x128xf32>
    %59 = arith.addf %9, %58 : vector<8x128xf32>
    %c0_32 = arith.constant 0 : index
    %c0_33 = arith.constant 0 : index
    %c0_34 = arith.constant 0 : index
    %60 = vector.load %arg12[%c0_32, %c0_33, %c0_34] : memref<1x8x128xf32, #tpu.memory_space<vmem>>, vector<1x8x128xf32>
    %61 = vector.shape_cast %60 : vector<1x8x128xf32> to vector<8x128xf32>
    %62 = vector.shape_cast %59 : vector<8x128xf32> to vector<1x8x128xf32>
    tpu.vector_store %arg12[%c0_32, %c0_33, %c0_34], %62 {strides = array<i32>} : memref<1x8x128xf32, #tpu.memory_space<vmem>>, vector<1x8x128xf32>,
    return
  }
  func.func @transform_0(%arg0: i32, %arg1: i32) -> (i32, i32, i32) {
    %c0_i32 = arith.constant 0 : i32
    %c0_i32_0 = arith.constant 0 : i32
    return %arg0, %arg1, %c0_i32 : i32, i32, i32
  }
  func.func @transform_1(%arg0: i32, %arg1: i32) -> (i32, i32, i32) {
    %c0_i32 = arith.constant 0 : i32
    %c0_i32_0 = arith.constant 0 : i32
    return %arg0, %arg1, %c0_i32 : i32, i32, i32
  }
  func.func @transform_2(%arg0: i32, %arg1: i32) -> (i32, i32) {
    %c0_i32 = arith.constant 0 : i32
    %c0_i32_0 = arith.constant 0 : i32
    %c0_i32_1 = arith.constant 0 : i32
    return %c0_i32, %c0_i32_0 : i32, i32
  }
  func.func @transform_3(%arg0: i32, %arg1: i32) -> (i32, i32) {
    %c0_i32 = arith.constant 0 : i32
    %c0_i32_0 = arith.constant 0 : i32
    %c0_i32_1 = arith.constant 0 : i32
    return %c0_i32, %c0_i32_0 : i32, i32
  }
  func.func @transform_4(%arg0: i32, %arg1: i32) -> (i32, i32) {
    %c0_i32 = arith.constant 0 : i32
    %c0_i32_0 = arith.constant 0 : i32
    %c0_i32_1 = arith.constant 0 : i32
    return %c0_i32, %c0_i32_0 : i32, i32
  }
  func.func @transform_5(%arg0: i32, %arg1: i32) -> (i32, i32) {
    %c0_i32 = arith.constant 0 : i32
    %c0_i32_0 = arith.constant 0 : i32
    %c0_i32_1 = arith.constant 0 : i32
    return %c0_i32, %c0_i32_0 : i32, i32
  }
  func.func @transform_6(%arg0: i32, %arg1: i32) -> (i32, i32) {
    %c0_i32 = arith.constant 0 : i32
    %c0_i32_0 = arith.constant 0 : i32
    %c0_i32_1 = arith.constant 0 : i32
    return %c0_i32, %c0_i32_0 : i32, i32
  }
  func.func @transform_7(%arg0: i32, %arg1: i32) -> (i32, i32) {
    %c0_i32 = arith.constant 0 : i32
    %c0_i32_0 = arith.constant 0 : i32
    %c0_i32_1 = arith.constant 0 : i32
    return %c0_i32, %c0_i32_0 : i32, i32
  }
  func.func @transform_8(%arg0: i32, %arg1: i32) -> (i32, i32) {
    %c0_i32 = arith.constant 0 : i32
    %c0_i32_0 = arith.constant 0 : i32
    %c0_i32_1 = arith.constant 0 : i32
    return %c0_i32, %c0_i32_0 : i32, i32
  }
  func.func @transform_9(%arg0: i32, %arg1: i32) -> (i32, i32) {
    %c0_i32 = arith.constant 0 : i32
    %c0_i32_0 = arith.constant 0 : i32
    %c0_i32_1 = arith.constant 0 : i32
    return %c0_i32, %c0_i32_0 : i32, i32
  }
  func.func @transform_10(%arg0: i32, %arg1: i32) -> (i32, i32, i32) {
    %c0_i32 = arith.constant 0 : i32
    %c0_i32_0 = arith.constant 0 : i32
    return %arg0, %arg1, %c0_i32 : i32, i32, i32
  }
}

</mosaic_0001>

<llo_original>
// kernel: gpt2_block.3
$region0: #{gpt2_block.3}
  #allocation0 [shape = 'u32[]', space=smem, size = 0x4, offset = 0x4, fixed_abs, tag = 'smem constant byte address 0x4 - core index']
  #allocation1 [shape = 'u32[144,128]{1,0:T(1,128)}', space=vmem, size = 0x12000, scoped, tag = 'internal scratch']
  %s0 = inlined_call_operand.vmem [shape: f32[2,16,128], index: 0, kind: input, shape index: {}]
  %s1 = inlined_call_operand.vmem [shape: f32[1,128], index: 1, kind: input, shape index: {}]
  %s2 = inlined_call_operand.vmem [shape: f32[1,128], index: 2, kind: input, shape index: {}]
  %s3 = inlined_call_operand.vmem [shape: bf16[128,384], index: 3, kind: input, shape index: {}]
  %s4 = inlined_call_operand.vmem [shape: f32[1,384], index: 4, kind: input, shape index: {}]
  %s5 = inlined_call_operand.vmem [shape: bf16[2,16,128], index: 5, kind: output, shape index: {0}]
  %s6 = inlined_call_operand.vmem [shape: bf16[2,16,128], index: 6, kind: output, shape index: {1}]
  %s7 = inlined_call_operand.vmem [shape: bf16[2,16,128], index: 7, kind: output, shape index: {2}]
  %8 = xla_tuple %s5, %s6, %s7
  %s9 = sld [smem:[#allocation0]]
  $region69: #{gpt2_block.3} parent=0
    _
  %s11 = ssub.s32 1, %s9
  %s12 = scalar_select 0, %s11, %s9
  loop: start=0, step=1, limit=6
  $region2: #{gpt2_block.3} parent=0 // loop_pre_header
    _
  $region3: #{gpt2_block.3} parent=0 // loop_header
    %s14 = sphi 0, %s18
    %p15 = scmp.ge.s32.totalorder %s14, 6
    %s21 = sphi 0, %s33
    %s22 = sphi 0, %s29
    %s23 = sphi 0, %s21
    %s24 = sphi 0, %s22
    %s25 = sphi 0, %s23
    %s26 = sphi 0, %s24
    %s38 = sphi 0, %s40
    %s41 = sphi 0, %s38
    %s42 = sphi 0, %s41
    %s58 = sphi 0, %s42
    %s62 = sphi 0, %s62
    %s64 = sphi 0, %s62
    %s65 = sphi 0, %s64
    %s79 = sphi 0, %s65
    %s83 = sphi 0, %s83
    %s85 = sphi 0, %s83
    %s86 = sphi 0, %s85
    %s100 = sphi 0, %s86
    %s104 = sphi 0, %s104
    %s106 = sphi 0, %s104
    %s107 = sphi 0, %s106
    %s121 = sphi 0, %s107
    %s125 = sphi 0, %s125
    %s127 = sphi 0, %s125
    %s128 = sphi 0, %s127
    %s142 = sphi 0, %s128
    %s150 = sphi 0, %s152
    %s153 = sphi 0, %s150
    %s154 = sphi 0, %s153
    %s170 = sphi 0, %s154
    %s178 = sphi 0, %s180
    %s181 = sphi 0, %s178
    %s182 = sphi 0, %s181
    %s198 = sphi 0, %s182
    %s206 = sphi 0, %s208
    %s209 = sphi 0, %s206
    %s210 = sphi 0, %s209
    %s226 = sphi 0, %s210
  $region4: #{gpt2_block.3} parent=0 // loop_header_branch
    %17 = sbr.rel (%p15) target = $region8
  $region5: #{gpt2_block.3} parent=0 // loop_body
    %s19 = ssub.s32 %s14, 1
    %s20 = ssub.s32 %s14, 2
    %s27 = sadd.s32 1, %s22
    %p28 = scmp.ge.s32.totalorder %s27, 2
    %s29 = scalar_select %p28, 0, %s27
    %s30 = sadd.s32 1, %s21
    %s31 = scalar_select %p28, %s30, %s21
    %p32 = scmp.ge.s32.totalorder %s31, 2
    %s33 = scalar_select %p32, 0, %s31
    %s34 = ssub.s32 %s21, %s33
    %s35 = ssub.s32 %s22, %s29
    %s36 = sor.u32 %s34, %s35
    %p37 = scmp.eq.s32.totalorder %s36, 0
    %s39 = sadd.s32 %s38, 1
    %s40 = scalar_select %p37, %s38, %s39
    %p43 = pneg %p37
    %p44 = scmp.eq.s32.totalorder %s14, 3
    %p45 = por %p43, %p44
    %p46 = scmp.ne.s32.totalorder %s38, %s41
    %p47 = scmp.eq.s32.totalorder %s14, 0
    %p48 = por %p46, %p47
    %p49 = scmp.ne.s32.totalorder %s38, %s41
    %p50 = scmp.eq.s32.totalorder %s19, 3
    %p51 = por %p49, %p50
    %p52 = scmp.ne.s32.totalorder %s41, %s42
    %p53 = scmp.eq.s32.totalorder %s19, 0
    %p54 = por %p52, %p53
    %p55 = scmp.ne.s32.totalorder %s41, %s42
    %p56 = scmp.eq.s32.totalorder %s20, 3
    %p57 = por %p55, %p56
    %p59 = scmp.ne.s32.totalorder %s42, %s58
    %p60 = scmp.eq.s32.totalorder %s20, 0
    %p61 = por %p59, %p60
    %s63 = sadd.s32 %s62, 1
    %p66 = scmp.eq.s32.totalorder %s14, 3
    %p67 = scmp.ne.s32.totalorder %s62, %s64
    %p68 = scmp.eq.s32.totalorder %s14, 0
    %p69 = por %p67, %p68
    %p70 = scmp.ne.s32.totalorder %s62, %s64
    %p71 = scmp.eq.s32.totalorder %s19, 3
    %p72 = por %p70, %p71
    %p73 = scmp.ne.s32.totalorder %s64, %s65
    %p74 = scmp.eq.s32.totalorder %s19, 0
    %p75 = por %p73, %p74
    %p76 = scmp.ne.s32.totalorder %s64, %s65
    %p77 = scmp.eq.s32.totalorder %s20, 3
    %p78 = por %p76, %p77
    %p80 = scmp.ne.s32.totalorder %s65, %s79
    %p81 = scmp.eq.s32.totalorder %s20, 0
    %p82 = por %p80, %p81
    %s84 = sadd.s32 %s83, 1
    %p87 = scmp.eq.s32.totalorder %s14, 3
    %p88 = scmp.ne.s32.totalorder %s83, %s85
    %p89 = scmp.eq.s32.totalorder %s14, 0
    %p90 = por %p88, %p89
    %p91 = scmp.ne.s32.totalorder %s83, %s85
    %p92 = scmp.eq.s32.totalorder %s19, 3
    %p93 = por %p91, %p92
    %p94 = scmp.ne.s32.totalorder %s85, %s86
    %p95 = scmp.eq.s32.totalorder %s19, 0
    %p96 = por %p94, %p95
    %p97 = scmp.ne.s32.totalorder %s85, %s86
    %p98 = scmp.eq.s32.totalorder %s20, 3
    %p99 = por %p97, %p98
    %p101 = scmp.ne.s32.totalorder %s86, %s100
    %p102 = scmp.eq.s32.totalorder %s20, 0
    %p103 = por %p101, %p102
    %s105 = sadd.s32 %s104, 1
    %p108 = scmp.eq.s32.totalorder %s14, 3
    %p109 = scmp.ne.s32.totalorder %s104, %s106
    %p110 = scmp.eq.s32.totalorder %s14, 0
    %p111 = por %p109, %p110
    %p112 = scmp.ne.s32.totalorder %s104, %s106
    %p113 = scmp.eq.s32.totalorder %s19, 3
    %p114 = por %p112, %p113
    %p115 = scmp.ne.s32.totalorder %s106, %s107
    %p116 = scmp.eq.s32.totalorder %s19, 0
    %p117 = por %p115, %p116
    %p118 = scmp.ne.s32.totalorder %s106, %s107
    %p119 = scmp.eq.s32.totalorder %s20, 3
    %p120 = por %p118, %p119
    %p122 = scmp.ne.s32.totalorder %s107, %s121
    %p123 = scmp.eq.s32.totalorder %s20, 0
    %p124 = por %p122, %p123
    %s126 = sadd.s32 %s125, 1
    %p129 = scmp.eq.s32.totalorder %s14, 3
    %p130 = scmp.ne.s32.totalorder %s125, %s127
    %p131 = scmp.eq.s32.totalorder %s14, 0
    %p132 = por %p130, %p131
    %p133 = scmp.ne.s32.totalorder %s125, %s127
    %p134 = scmp.eq.s32.totalorder %s19, 3
    %p135 = por %p133, %p134
    %p136 = scmp.ne.s32.totalorder %s127, %s128
    %p137 = scmp.eq.s32.totalorder %s19, 0
    %p138 = por %p136, %p137
    %p139 = scmp.ne.s32.totalorder %s127, %s128
    %p140 = scmp.eq.s32.totalorder %s20, 3
    %p141 = por %p139, %p140
    %p143 = scmp.ne.s32.totalorder %s128, %s142
    %p144 = scmp.eq.s32.totalorder %s20, 0
    %p145 = por %p143, %p144
    %s146 = ssub.s32 %s21, %s33
    %s147 = ssub.s32 %s22, %s29
    %s148 = sor.u32 %s146, %s147
    %p149 = scmp.eq.s32.totalorder %s148, 0
    %s151 = sadd.s32 %s150, 1
    %s152 = scalar_select %p149, %s150, %s151
    %p155 = pneg %p149
    %p156 = scmp.eq.s32.totalorder %s14, 3
    %p157 = por %p155, %p156
    %p158 = scmp.ne.s32.totalorder %s150, %s153
    %p159 = scmp.eq.s32.totalorder %s14, 0
    %p160 = por %p158, %p159
    %p161 = scmp.ne.s32.totalorder %s150, %s153
    %p162 = scmp.eq.s32.totalorder %s19, 3
    %p163 = por %p161, %p162
    %p164 = scmp.ne.s32.totalorder %s153, %s154
    %p165 = scmp.eq.s32.totalorder %s19, 0
    %p166 = por %p164, %p165
    %p167 = scmp.ne.s32.totalorder %s153, %s154
    %p168 = scmp.eq.s32.totalorder %s20, 3
    %p169 = por %p167, %p168
    %p171 = scmp.ne.s32.totalorder %s154, %s170
    %p172 = scmp.eq.s32.totalorder %s20, 0
    %p173 = por %p171, %p172
    %s174 = ssub.s32 %s21, %s33
    %s175 = ssub.s32 %s22, %s29
    %s176 = sor.u32 %s174, %s175
    %p177 = scmp.eq.s32.totalorder %s176, 0
    %s179 = sadd.s32 %s178, 1
    %s180 = scalar_select %p177, %s178, %s179
    %p183 = pneg %p177
    %p184 = scmp.eq.s32.totalorder %s14, 3
    %p185 = por %p183, %p184
    %p186 = scmp.ne.s32.totalorder %s178, %s181
    %p187 = scmp.eq.s32.totalorder %s14, 0
    %p188 = por %p186, %p187
    %p189 = scmp.ne.s32.totalorder %s178, %s181
    %p190 = scmp.eq.s32.totalorder %s19, 3
    %p191 = por %p189, %p190
    %p192 = scmp.ne.s32.totalorder %s181, %s182
    %p193 = scmp.eq.s32.totalorder %s19, 0
    %p194 = por %p192, %p193
    %p195 = scmp.ne.s32.totalorder %s181, %s182
    %p196 = scmp.eq.s32.totalorder %s20, 3
    %p197 = por %p195, %p196
    %p199 = scmp.ne.s32.totalorder %s182, %s198
    %p200 = scmp.eq.s32.totalorder %s20, 0
    %p201 = por %p199, %p200
    %s202 = ssub.s32 %s21, %s33
    %s203 = ssub.s32 %s22, %s29
    %s204 = sor.u32 %s202, %s203
    %p205 = scmp.eq.s32.totalorder %s204, 0
    %s207 = sadd.s32 %s206, 1
    %s208 = scalar_select %p205, %s206, %s207
    %p211 = pneg %p205
    %p212 = scmp.eq.s32.totalorder %s14, 3
    %p213 = por %p211, %p212
    %p214 = scmp.ne.s32.totalorder %s206, %s209
    %p215 = scmp.eq.s32.totalorder %s14, 0
    %p216 = por %p214, %p215
    %p217 = scmp.ne.s32.totalorder %s206, %s209
    %p218 = scmp.eq.s32.totalorder %s19, 3
    %p219 = por %p217, %p218
    %p220 = scmp.ne.s32.totalorder %s209, %s210
    %p221 = scmp.eq.s32.totalorder %s19, 0
    %p222 = por %p220, %p221
    %p223 = scmp.ne.s32.totalorder %s209, %s210
    %p224 = scmp.eq.s32.totalorder %s20, 3
    %p225 = por %p223, %p224
    %p227 = scmp.ne.s32.totalorder %s210, %s226
    %p228 = scmp.eq.s32.totalorder %s20, 0
    %p229 = por %p227, %p228
    %p230 = scmp.le.s32.totalorder 1, %s14
    %p231 = scmp.lt.s32.totalorder %s14, 5
    %p232 = pnand %p230, %p231
    %p233 = pneg %p232
    // Predicated region
    $region9: #{gpt2_block.3} parent=5 // pred_check
      _
    $region10: #{gpt2_block.3} parent=5 // pred_check_branch
      %235 = sbr.rel (%p232) target = $region12
    $region11: #{gpt2_block.3} parent=5 // pred_region
      %s236 = ssub.s32 %s14, 1
      // Predicated region
      $region13: #{gpt2_block.3} parent=11 // pred_check
        %p237 = pneg %p75
      $region14: #{gpt2_block.3} parent=11 // pred_check_branch
        %239 = sbr.rel (%p237) target = $region16
      $region15: #{gpt2_block.3} parent=11 // pred_region
        _
      $region16: #{gpt2_block.3} parent=11 // pred_fallthru
        _
      // Predicated region
      $region17: #{gpt2_block.3} parent=11 // pred_check
        %p240 = pneg %p96
      $region18: #{gpt2_block.3} parent=11 // pred_check_branch
        %242 = sbr.rel (%p240) target = $region20
      $region19: #{gpt2_block.3} parent=11 // pred_region
        _
      $region20: #{gpt2_block.3} parent=11 // pred_fallthru
        _
      // Predicated region
      $region21: #{gpt2_block.3} parent=11 // pred_check
        %p243 = pneg %p117
      $region22: #{gpt2_block.3} parent=11 // pred_check_branch
        %245 = sbr.rel (%p243) target = $region24
      $region23: #{gpt2_block.3} parent=11 // pred_region
        _
      $region24: #{gpt2_block.3} parent=11 // pred_fallthru
        _
      // Predicated region
      $region25: #{gpt2_block.3} parent=11 // pred_check
        %p246 = pneg %p138
      $region26: #{gpt2_block.3} parent=11 // pred_check_branch
        %248 = sbr.rel (%p246) target = $region28
      $region27: #{gpt2_block.3} parent=11 // pred_region
        _
      $region28: #{gpt2_block.3} parent=11 // pred_fallthru
        _
    $region12: #{gpt2_block.3} parent=5 // pred_fallthru
      _
    %p249 = scmp.lt.s32.totalorder %s14, 4
    // Predicated region
    $region29: #{gpt2_block.3} parent=5 // pred_check
      %p250 = pneg %p249
    $region30: #{gpt2_block.3} parent=5 // pred_check_branch
      %252 = sbr.rel (%p250) target = $region32
    $region31: #{gpt2_block.3} parent=5 // pred_region
      // Predicated region
      $region33: #{gpt2_block.3} parent=31 // pred_check
        %p253 = pneg %p48
      $region34: #{gpt2_block.3} parent=31 // pred_check_branch
        %255 = sbr.rel (%p253) target = $region36
      $region35: #{gpt2_block.3} parent=31 // pred_region
        %p256 = scmp.lt.s32.totalorder %s21, 1
        %s257 = scalar_select %p256, %s21, 1
        %p258 = scmp.lt.s32.totalorder %s22, 1
        %s259 = scalar_select %p258, %s22, 1
        %s260 = smul.addr %s257, 2
        %s261 = sadd.s32 %s259, %s260
        %s262 = smul.addr %s261, 8
        %s263 = scalar_lea.vmem %s0, %s262
      $region36: #{gpt2_block.3} parent=31 // pred_fallthru
        _
    $region32: #{gpt2_block.3} parent=5 // pred_fallthru
      _
    %p264 = scmp.le.s32.totalorder 1, %s14
    %p265 = scmp.lt.s32.totalorder %s14, 5
    %p266 = pnand %p264, %p265
    %p267 = pneg %p266
    // Predicated region
    $region37: #{gpt2_block.3} parent=5 // pred_check
      _
    $region38: #{gpt2_block.3} parent=5 // pred_check_branch
      %269 = sbr.rel (%p266) target = $region40
    $region39: #{gpt2_block.3} parent=5 // pred_region
      %s270 = ssub.s32 %s14, 1
      %p271 = scmp.lt.s32.totalorder %s23, 1
      %s272 = scalar_select %p271, %s23, 1
      %p273 = scmp.lt.s32.totalorder %s24, 1
      %s274 = scalar_select %p273, %s24, 1
      %s275 = smul.addr %s272, 2
      %s276 = sadd.s32 %s274, %s275
      %s277 = smul.addr %s276, 8
      %s278 = scalar_lea.vmem %s0, %s277
      %p279 = pneg %p54
      %p280 = pneg %p51
      %p281 = pneg %p75
      %p282 = pneg %p72
      %p283 = pneg %p96
      %p284 = pneg %p93
      %p285 = pneg %p117
      %p286 = pneg %p114
      %p287 = pneg %p138
      %p288 = pneg %p135
      %p289 = pneg %p166
      %p290 = pneg %p163
      %p291 = scmp.lt.s32.totalorder %s23, 1
      %s292 = scalar_select %p291, %s23, 1
      %p293 = scmp.lt.s32.totalorder %s24, 1
      %s294 = scalar_select %p293, %s24, 1
      %s295 = smul.addr %s292, 2
      %s296 = sadd.s32 %s294, %s295
      %s297 = smul.addr %s296, 4
      %s298 = scalar_lea.vmem %s5, %s297
      %p299 = pneg %p194
      %p300 = pneg %p191
      %p301 = scmp.lt.s32.totalorder %s23, 1
      %s302 = scalar_select %p301, %s23, 1
      %p303 = scmp.lt.s32.totalorder %s24, 1
      %s304 = scalar_select %p303, %s24, 1
      %s305 = smul.addr %s302, 2
      %s306 = sadd.s32 %s304, %s305
      %s307 = smul.addr %s306, 4
      %s308 = scalar_lea.vmem %s6, %s307
      %p309 = pneg %p222
      %p310 = pneg %p219
      %p311 = scmp.lt.s32.totalorder %s23, 1
      %s312 = scalar_select %p311, %s23, 1
      %p313 = scmp.lt.s32.totalorder %s24, 1
      %s314 = scalar_select %p313, %s24, 1
      %s315 = smul.addr %s312, 2
      %s316 = sadd.s32 %s314, %s315
      %s317 = smul.addr %s316, 4
      %s318 = scalar_lea.vmem %s7, %s317
      %p319 = scmp.lt.s32.totalorder %s23, 1
      %s320 = scalar_select %p319, %s23, 1
      %p321 = scmp.lt.s32.totalorder %s24, 1
      %s322 = scalar_select %p321, %s24, 1
      %s323 = smul.addr %s320, 2
      %s324 = sadd.s32 %s322, %s323
      %s325 = smul.addr %s324, 8
      %s326 = scalar_lea.vmem %s0, %s325
      %p327 = scmp.lt.s32.totalorder %s23, 1
      %s328 = scalar_select %p327, %s23, 1
      %p329 = scmp.lt.s32.totalorder %s24, 1
      %s330 = scalar_select %p329, %s24, 1
      %s331 = smul.addr %s328, 2
      %s332 = sadd.s32 %s330, %s331
      %s333 = smul.addr %s332, 4
      %s334 = scalar_lea.vmem %s5, %s333
      %p335 = scmp.lt.s32.totalorder %s23, 1
      %s336 = scalar_select %p335, %s23, 1
      %p337 = scmp.lt.s32.totalorder %s24, 1
      %s338 = scalar_select %p337, %s24, 1
      %s339 = smul.addr %s336, 2
      %s340 = sadd.s32 %s338, %s339
      %s341 = smul.addr %s340, 4
      %s342 = scalar_lea.vmem %s6, %s341
      %p343 = scmp.lt.s32.totalorder %s23, 1
      %s344 = scalar_select %p343, %s23, 1
      %p345 = scmp.lt.s32.totalorder %s24, 1
      %s346 = scalar_select %p345, %s24, 1
      %s347 = smul.addr %s344, 2
      %s348 = sadd.s32 %s346, %s347
      %s349 = smul.addr %s348, 4
      %s350 = scalar_lea.vmem %s7, %s349
      %v352 = vld [vmem:[%s326] sm:$0xff]
      %v353 = vld [vmem:[%s1] sm:$0x1]
      %v354 = vld [vmem:[%s2] sm:$0x1]
      %355 = vadd.xlane.f32.xlu0 %v352
      %v356 = vpop.xlane.xlu0 %355
      %v357 = vrcp.pop 128.0
      %v358 = vmul.f32 %v356, %v357
      %v359 = vsub.f32 %v352, %v358
      %v360 = vmul.f32 %v359, %v359
      %361 = vadd.xlane.f32.xlu0 %v360
      %v362 = vpop.xlane.xlu0 %361
      %v363 = vmul.f32 %v362, %v357
      %v364 = vadd.f32 %v363, 1e-05
      %v365 = vrsqrt.pop %v364
      %v366 = vmul.f32 %v359, %v365
      %v368 = vlaneseq
      %v369 = vshrl.u32 %v368, 7
      %v370 = vsub.s32 0, %v369
      %v371 = vrot.slane %v353, %v370
      %v373 = vmul.f32 %v366, %v371
      %v375 = vlaneseq
      %v376 = vshrl.u32 %v375, 7
      %v377 = vsub.s32 0, %v376
      %v378 = vrot.slane %v354, %v377
      %v380 = vadd.f32 %v373, %v378
      %v381 = vpack.c.bf16 %v380, %v380
      %v382 = vld [vmem:[%s3] sm:$0xff]
      %v383 = vld [vmem:[%s3 + $0x8] sm:$0xf]
      %v384 = vld [vmem:[%s3 + $0xc] sm:$0xff]
      %v385 = vld [vmem:[%s3 + $0x14] sm:$0xf]
      %v386 = vld [vmem:[%s3 + $0x18] sm:$0xff]
      %v387 = vld [vmem:[%s3 + $0x20] sm:$0xf]
      %v388 = vld [vmem:[%s3 + $0x24] sm:$0xff]
      %v389 = vld [vmem:[%s3 + $0x2c] sm:$0xf]
      %v390 = vld [vmem:[%s3 + $0x30] sm:$0xff]
      %v391 = vld [vmem:[%s3 + $0x38] sm:$0xf]
      %v392 = vld [vmem:[%s3 + $0x3c] sm:$0xff]
      %v393 = vld [vmem:[%s3 + $0x44] sm:$0xf]
      %v394 = vld [vmem:[%s3 + $0x48] sm:$0xff]
      %v395 = vld [vmem:[%s3 + $0x50] sm:$0xf]
      %v396 = vld [vmem:[%s3 + $0x54] sm:$0xff]
      %v397 = vld [vmem:[%s3 + $0x5c] sm:$0xf]
      %v398 = vld [vmem:[%s3 + $0x60] sm:$0xff]
      %v399 = vld [vmem:[%s3 + $0x68] sm:$0xf]
      %v400 = vld [vmem:[%s3 + $0x6c] sm:$0xff]
      %v401 = vld [vmem:[%s3 + $0x74] sm:$0xf]
      %v402 = vld [vmem:[%s3 + $0x78] sm:$0xff]
      %v403 = vld [vmem:[%s3 + $0x80] sm:$0xf]
      %v404 = vld [vmem:[%s3 + $0x84] sm:$0xff]
      %v405 = vld [vmem:[%s3 + $0x8c] sm:$0xf]
      %v406 = vld [vmem:[%s3 + $0x90] sm:$0xff]
      %v407 = vld [vmem:[%s3 + $0x98] sm:$0xf]
      %v408 = vld [vmem:[%s3 + $0x9c] sm:$0xff]
      %v409 = vld [vmem:[%s3 + $0xa4] sm:$0xf]
      %v410 = vld [vmem:[%s3 + $0xa8] sm:$0xff]
      %v411 = vld [vmem:[%s3 + $0xb0] sm:$0xf]
      %v412 = vld [vmem:[%s3 + $0xb4] sm:$0xff]
      %v413 = vld [vmem:[%s3 + $0xbc] sm:$0xf]
      %v414 = vld [vmem:[%s4] sm:$0x7]
      %v416 = vlaneseq
      %v417 = vshrl.u32 %v416, 7
      %v418 = vsub.s32 0, %v417
      %v419 = vrot.slane %v414, %v418
      %v420 = vlaneseq
      %v421 = vshrl.u32 %v420, 7
      %v422 = vsub.s32 1, %v421
      %v423 = vrot.slane %v414, %v422
      %v424 = vlaneseq
      %v425 = vshrl.u32 %v424, 7
      %v426 = vsub.s32 2, %v425
      %v427 = vrot.slane %v414, %v426
      %v463 = vunpack.c.l.b16 %v382
      %v464 = vunpack.c.h.b16 %v382
      %v465 = vunpack.c.l.b16 %v383
      %v466 = vunpack.c.l.b16 %v384
      %v467 = vunpack.c.h.b16 %v384
      %v468 = vunpack.c.l.b16 %v385
      %v469 = vunpack.c.l.b16 %v386
      %v470 = vunpack.c.h.b16 %v386
      %v471 = vunpack.c.l.b16 %v387
      %v472 = vunpack.c.l.b16 %v388
      %v473 = vunpack.c.h.b16 %v388
      %v474 = vunpack.c.l.b16 %v389
      %v475 = vunpack.c.l.b16 %v390
      %v476 = vunpack.c.h.b16 %v390
      %v477 = vunpack.c.l.b16 %v391
      %v478 = vunpack.c.l.b16 %v392
      %v479 = vunpack.c.h.b16 %v392
      %v480 = vunpack.c.l.b16 %v393
      %v481 = vunpack.c.l.b16 %v394
      %v482 = vunpack.c.h.b16 %v394
      %v483 = vunpack.c.l.b16 %v395
      %v484 = vunpack.c.l.b16 %v396
      %v485 = vunpack.c.h.b16 %v396
      %v486 = vunpack.c.l.b16 %v397
      %v487 = vunpack.c.l.b16 %v398
      %v488 = vunpack.c.h.b16 %v398
      %v489 = vunpack.c.l.b16 %v399
      %v490 = vunpack.c.l.b16 %v400
      %v491 = vunpack.c.h.b16 %v400
      %v492 = vunpack.c.l.b16 %v401
      %v493 = vunpack.c.l.b16 %v402
      %v494 = vunpack.c.h.b16 %v402
      %v495 = vunpack.c.l.b16 %v403
      %v496 = vunpack.c.l.b16 %v404
      %v497 = vunpack.c.h.b16 %v404
      %v498 = vunpack.c.l.b16 %v405
      %v499 = vunpack.c.l.b16 %v406
      %v500 = vunpack.c.h.b16 %v406
      %v501 = vunpack.c.l.b16 %v407
      %v502 = vunpack.c.l.b16 %v408
      %v503 = vunpack.c.h.b16 %v408
      %v504 = vunpack.c.l.b16 %v409
      %v505 = vunpack.c.l.b16 %v410
      %v506 = vunpack.c.h.b16 %v410
      %v507 = vunpack.c.l.b16 %v411
      %v508 = vunpack.c.l.b16 %v412
      %v509 = vunpack.c.h.b16 %v412
      %v510 = vunpack.c.l.b16 %v413
      %v511 = vpack.c.b16 %v466, %v463
      %v512 = vpack.c.b16 %v467, %v464
      %v513 = vpack.c.b16 %v468, %v465
      %v514 = vpack.c.b16 %v472, %v469
      %v515 = vpack.c.b16 %v473, %v470
      %v516 = vpack.c.b16 %v474, %v471
      %v517 = vpack.c.b16 %v478, %v475
      %v518 = vpack.c.b16 %v479, %v476
      %v519 = vpack.c.b16 %v480, %v477
      %v520 = vpack.c.b16 %v484, %v481
      %v521 = vpack.c.b16 %v485, %v482
      %v522 = vpack.c.b16 %v486, %v483
      %v523 = vpack.c.b16 %v490, %v487
      %v524 = vpack.c.b16 %v491, %v488
      %v525 = vpack.c.b16 %v492, %v489
      %v526 = vpack.c.b16 %v496, %v493
      %v527 = vpack.c.b16 %v497, %v494
      %v528 = vpack.c.b16 %v498, %v495
      %v529 = vpack.c.b16 %v502, %v499
      %v530 = vpack.c.b16 %v503, %v500
      %v531 = vpack.c.b16 %v504, %v501
      %v532 = vpack.c.b16 %v508, %v505
      %v533 = vpack.c.b16 %v509, %v506
      %v534 = vpack.c.b16 %v510, %v507
      %559 = vmatprep.subr.bf16.mxu0 %v512
      %560 = vmatpush1.bf16.msra.mxu0 %v511
      %561 = vmatprep.subr.bf16.mxu0 %v515
      %562 = vmatpush1.bf16.msra.mxu0 %v514
      %563 = vmatprep.subr.bf16.mxu0 %v518
      %564 = vmatpush1.bf16.msra.mxu0 %v517
      %565 = vmatprep.subr.bf16.mxu0 %v521
      %566 = vmatpush1.bf16.msra.mxu0 %v520
      %567 = vmatprep.subr.bf16.mxu0 %v524
      %568 = vmatpush1.bf16.msra.mxu0 %v523
      %569 = vmatprep.subr.bf16.mxu0 %v527
      %570 = vmatpush1.bf16.msra.mxu0 %v526
      %571 = vmatprep.subr.bf16.mxu0 %v530
      %572 = vmatpush1.bf16.msra.mxu0 %v529
      %573 = vmatprep.subr.bf16.mxu0 %v533
      %574 = vmatpush1.bf16.msra.mxu0 %v532
      %575 = vmatprep.subr.bf16.mxu0 0
      %576 = vmatpush1.bf16.msra.mxu0 0
      %577 = vmatprep.subr.bf16.mxu0 0
      %578 = vmatpush1.bf16.msra.mxu0 0
      %579 = vmatprep.subr.bf16.mxu0 0
      %580 = vmatpush1.bf16.msra.mxu0 0
      %581 = vmatprep.subr.bf16.mxu0 0
      %582 = vmatpush1.bf16.msra.mxu0 0
      %583 = vmatprep.subr.bf16.mxu0 0
      %584 = vmatpush1.bf16.msra.mxu0 0
      %585 = vmatprep.subr.bf16.mxu0 0
      %586 = vmatpush1.bf16.msra.mxu0 0
      %587 = vmatprep.subr.bf16.mxu0 0
      %588 = vmatpush1.bf16.msra.mxu0 0
      %589 = vmatprep.subr.bf16.mxu0 0
      %590 = vmatpush1.bf16.msra.mxu0 0
      %591 = vmatprep.mubr.bf16.mxu0 0
      %592 = vmatmul.mubr.bf16.gmra.mrb[0].mxu0 %v381
      %v593 = vpop.f32.mrb[0].mxu0
      %v594 = vadd.f32 %v419, %v593
      %v595 = vpop.f32.mrb[0].mxu0
      %v596 = vadd.f32 %v423, %v595
      %v597 = vpop.f32.mrb[0].mxu0
      %v598 = vpop.f32.mrb[0].mxu0
      %599 = vdwg.mxu0
      %600 = vmatprep.subr.bf16.mxu0 0
      %601 = vmatpush1.bf16.msra.mxu0 %v513
      %602 = vmatprep.subr.bf16.mxu0 0
      %603 = vmatpush1.bf16.msra.mxu0 %v516
      %604 = vmatprep.subr.bf16.mxu0 0
      %605 = vmatpush1.bf16.msra.mxu0 %v519
      %606 = vmatprep.subr.bf16.mxu0 0
      %607 = vmatpush1.bf16.msra.mxu0 %v522
      %608 = vmatprep.subr.bf16.mxu0 0
      %609 = vmatpush1.bf16.msra.mxu0 %v525
      %610 = vmatprep.subr.bf16.mxu0 0
      %611 = vmatpush1.bf16.msra.mxu0 %v528
      %612 = vmatprep.subr.bf16.mxu0 0
      %613 = vmatpush1.bf16.msra.mxu0 %v531
      %614 = vmatprep.subr.bf16.mxu0 0
      %615 = vmatpush1.bf16.msra.mxu0 %v534
      %616 = vmatprep.subr.bf16.mxu0 0
      %617 = vmatpush1.bf16.msra.mxu0 0
      %618 = vmatprep.subr.bf16.mxu0 0
      %619 = vmatpush1.bf16.msra.mxu0 0
      %620 = vmatprep.subr.bf16.mxu0 0
      %621 = vmatpush1.bf16.msra.mxu0 0
      %622 = vmatprep.subr.bf16.mxu0 0
      %623 = vmatpush1.bf16.msra.mxu0 0
      %624 = vmatprep.subr.bf16.mxu0 0
      %625 = vmatpush1.bf16.msra.mxu0 0
      %626 = vmatprep.subr.bf16.mxu0 0
      %627 = vmatpush1.bf16.msra.mxu0 0
      %628 = vmatprep.subr.bf16.mxu0 0
      %629 = vmatpush1.bf16.msra.mxu0 0
      %630 = vmatprep.subr.bf16.mxu0 0
      %631 = vmatpush1.bf16.msra.mxu0 0
      %632 = vmatprep.mubr.bf16.mxu0 0
      %633 = vmatmul.mubr.bf16.gmra.mrb[0].mxu0 %v381
      %v634 = vpop.f32.mrb[0].mxu0
      %v635 = vadd.f32 %v427, %v634
      %v636 = vpop.f32.mrb[0].mxu0
      %v637 = vpop.f32.mrb[0].mxu0
      %v638 = vpop.f32.mrb[0].mxu0
      %639 = vdwg.mxu0
      %v640 = vpack.c.bf16 %v594, %v594
      %641 = vst [vmem:[%s334] sm:$0xf] %v640
      %v642 = vpack.c.bf16 %v596, %v596
      %643 = vst [vmem:[%s342] sm:$0xf] %v642
      %v644 = vpack.c.bf16 %v635, %v635
      %645 = vst [vmem:[%s350] sm:$0xf] %v644
      %p646 = scmp.lt.s32.totalorder %s23, 1
      %s647 = scalar_select %p646, %s23, 1
      %p648 = scmp.lt.s32.totalorder %s24, 1
      %s649 = scalar_select %p648, %s24, 1
      %s650 = smul.addr %s647, 2
      %s651 = sadd.s32 %s649, %s650
      %s652 = smul.addr %s651, 4
      %s653 = scalar_lea.vmem %s5, %s652
      %p654 = scmp.lt.s32.totalorder %s23, 1
      %s655 = scalar_select %p654, %s23, 1
      %p656 = scmp.lt.s32.totalorder %s24, 1
      %s657 = scalar_select %p656, %s24, 1
      %s658 = smul.addr %s655, 2
      %s659 = sadd.s32 %s657, %s658
      %s660 = smul.addr %s659, 4
      %s661 = scalar_lea.vmem %s6, %s660
      %p662 = scmp.lt.s32.totalorder %s23, 1
      %s663 = scalar_select %p662, %s23, 1
      %p664 = scmp.lt.s32.totalorder %s24, 1
      %s665 = scalar_select %p664, %s24, 1
      %s666 = smul.addr %s663, 2
      %s667 = sadd.s32 %s665, %s666
      %s668 = smul.addr %s667, 4
      %s669 = scalar_lea.vmem %s7, %s668
      // Predicated region
      $region41: #{gpt2_block.3} parent=39 // pred_check
        %p670 = pneg %p163
      $region42: #{gpt2_block.3} parent=39 // pred_check_branch
        %672 = sbr.rel (%p670) target = $region44
      $region43: #{gpt2_block.3} parent=39 // pred_region
        _
      $region44: #{gpt2_block.3} parent=39 // pred_fallthru
        _
      // Predicated region
      $region45: #{gpt2_block.3} parent=39 // pred_check
        %p673 = pneg %p191
      $region46: #{gpt2_block.3} parent=39 // pred_check_branch
        %675 = sbr.rel (%p673) target = $region48
      $region47: #{gpt2_block.3} parent=39 // pred_region
        _
      $region48: #{gpt2_block.3} parent=39 // pred_fallthru
        _
      // Predicated region
      $region49: #{gpt2_block.3} parent=39 // pred_check
        %p676 = pneg %p219
      $region50: #{gpt2_block.3} parent=39 // pred_check_branch
        %678 = sbr.rel (%p676) target = $region52
      $region51: #{gpt2_block.3} parent=39 // pred_region
        _
      $region52: #{gpt2_block.3} parent=39 // pred_fallthru
        _
    $region40: #{gpt2_block.3} parent=5 // pred_fallthru
      _
    %p679 = scmp.le.s32.totalorder 2, %s14
    // Predicated region
    $region53: #{gpt2_block.3} parent=5 // pred_check
      %p680 = pneg %p679
    $region54: #{gpt2_block.3} parent=5 // pred_check_branch
      %682 = sbr.rel (%p680) target = $region56
    $region55: #{gpt2_block.3} parent=5 // pred_region
      %s683 = ssub.s32 %s14, 2
      // Predicated region
      $region57: #{gpt2_block.3} parent=55 // pred_check
        %p684 = pneg %p169
      $region58: #{gpt2_block.3} parent=55 // pred_check_branch
        %686 = sbr.rel (%p684) target = $region60
      $region59: #{gpt2_block.3} parent=55 // pred_region
        %p687 = scmp.lt.s32.totalorder %s25, 1
        %s688 = scalar_select %p687, %s25, 1
        %p689 = scmp.lt.s32.totalorder %s26, 1
        %s690 = scalar_select %p689, %s26, 1
        %s691 = smul.addr %s688, 2
        %s692 = sadd.s32 %s690, %s691
        %s693 = smul.addr %s692, 4
        %s694 = scalar_lea.vmem %s5, %s693
      $region60: #{gpt2_block.3} parent=55 // pred_fallthru
        _
      // Predicated region
      $region61: #{gpt2_block.3} parent=55 // pred_check
        %p695 = pneg %p197
      $region62: #{gpt2_block.3} parent=55 // pred_check_branch
        %697 = sbr.rel (%p695) target = $region64
      $region63: #{gpt2_block.3} parent=55 // pred_region
        %p698 = scmp.lt.s32.totalorder %s25, 1
        %s699 = scalar_select %p698, %s25, 1
        %p700 = scmp.lt.s32.totalorder %s26, 1
        %s701 = scalar_select %p700, %s26, 1
        %s702 = smul.addr %s699, 2
        %s703 = sadd.s32 %s701, %s702
        %s704 = smul.addr %s703, 4
        %s705 = scalar_lea.vmem %s6, %s704
      $region64: #{gpt2_block.3} parent=55 // pred_fallthru
        _
      // Predicated region
      $region65: #{gpt2_block.3} parent=55 // pred_check
        %p706 = pneg %p225
      $region66: #{gpt2_block.3} parent=55 // pred_check_branch
        %708 = sbr.rel (%p706) target = $region68
      $region67: #{gpt2_block.3} parent=55 // pred_region
        %p709 = scmp.lt.s32.totalorder %s25, 1
        %s710 = scalar_select %p709, %s25, 1
        %p711 = scmp.lt.s32.totalorder %s26, 1
        %s712 = scalar_select %p711, %s26, 1
        %s713 = smul.addr %s710, 2
        %s714 = sadd.s32 %s712, %s713
        %s715 = smul.addr %s714, 4
        %s716 = scalar_lea.vmem %s7, %s715
      $region68: #{gpt2_block.3} parent=55 // pred_fallthru
        _
    $region56: #{gpt2_block.3} parent=5 // pred_fallthru
      _
  $region6: #{gpt2_block.3} parent=0 // loop_footer
    %s18 = sadd.s32 1, %s14
  $region7: #{gpt2_block.3} parent=0 // loop_footer_branch
    %13 = sbr.rel target = $region3
  $region8: #{gpt2_block.3} parent=0 // loop_exit
    _

// kernel: gpt2_block.4
$region0: #{gpt2_block.4}
  #allocation0 [shape = 'u32[]', space=smem, size = 0x4, offset = 0x4, fixed_abs, tag = 'smem constant byte address 0x4 - core index']
  #allocation1 [shape = 'u32[144,128]{1,0:T(1,128)}', space=vmem, size = 0x12000, scoped, tag = 'internal scratch']
  #allocation2 [shape = 'f32[8,1]{1,0:T(8,128)}', space=vmem, size = 0x1000, scoped, tag = 'scratch operand']
  #allocation3 [shape = 'f32[8,1]{1,0:T(8,128)}', space=vmem, size = 0x1000, scoped, tag = 'scratch operand']
  #allocation4 [shape = 'f32[8,32]{1,0:T(8,128)}', space=vmem, size = 0x1000, scoped, tag = 'scratch operand']
  %s0 = inlined_call_operand.vmem [shape: bf16[2,4,16,32], index: 0, kind: input, shape index: {}]
  %s1 = inlined_call_operand.vmem [shape: bf16[2,4,16,32], index: 1, kind: input, shape index: {}]
  %s2 = inlined_call_operand.vmem [shape: bf16[2,4,16,32], index: 2, kind: input, shape index: {}]
  %s3 = inlined_call_operand.vmem [shape: bf16[2,4,16,32], index: 3, kind: output, shape index: {}]
  %s4 = sld [smem:[#allocation0]]
  $region57: #{gpt2_block.4} parent=0
    _
  %s6 = ssub.s32 1, %s4
  %s7 = scalar_select 0, %s6, %s4
  loop: start=0, step=1, limit=34
  $region2: #{gpt2_block.4} parent=0 // loop_pre_header
    _
  $region3: #{gpt2_block.4} parent=0 // loop_header
    %s9 = sphi 0, %s13
    %p10 = scmp.ge.s32.totalorder %s9, 34
    %s16 = sphi 0, %s42
    %s17 = sphi 0, %s38
    %s18 = sphi 0, %s34
    %s19 = sphi 0, %s30
    %s20 = sphi 0, %s16
    %s21 = sphi 0, %s17
    %s22 = sphi 0, %s18
    %s23 = sphi 0, %s19
    %s24 = sphi 0, %s20
    %s25 = sphi 0, %s21
    %s26 = sphi 0, %s22
    %s27 = sphi 0, %s23
    %s49 = sphi 0, %s51
    %s52 = sphi 0, %s49
    %s53 = sphi 0, %s52
    %s69 = sphi 0, %s53
    %s83 = sphi 0, %s85
    %s86 = sphi 0, %s83
    %s87 = sphi 0, %s86
    %s103 = sphi 0, %s87
    %s117 = sphi 0, %s119
    %s120 = sphi 0, %s117
    %s121 = sphi 0, %s120
    %s137 = sphi 0, %s121
    %s147 = sphi 0, %s149
    %s150 = sphi 0, %s147
    %s151 = sphi 0, %s150
    %s167 = sphi 0, %s151
  $region4: #{gpt2_block.4} parent=0 // loop_header_branch
    %12 = sbr.rel (%p10) target = $region8
  $region5: #{gpt2_block.4} parent=0 // loop_body
    %s14 = ssub.s32 %s9, 1
    %s15 = ssub.s32 %s9, 2
    %s28 = sadd.s32 1, %s19
    %p29 = scmp.ge.s32.totalorder %s28, 2
    %s30 = scalar_select %p29, 0, %s28
    %s31 = sadd.s32 1, %s18
    %s32 = scalar_select %p29, %s31, %s18
    %p33 = scmp.ge.s32.totalorder %s32, 2
    %s34 = scalar_select %p33, 0, %s32
    %s35 = sadd.s32 1, %s17
    %s36 = scalar_select %p33, %s35, %s17
    %p37 = scmp.ge.s32.totalorder %s36, 4
    %s38 = scalar_select %p37, 0, %s36
    %s39 = sadd.s32 1, %s16
    %s40 = scalar_select %p37, %s39, %s16
    %p41 = scmp.ge.s32.totalorder %s40, 2
    %s42 = scalar_select %p41, 0, %s40
    %s43 = ssub.s32 %s16, %s42
    %s44 = ssub.s32 %s17, %s38
    %s45 = sor.u32 %s43, %s44
    %s46 = ssub.s32 %s18, %s34
    %s47 = sor.u32 %s45, %s46
    %p48 = scmp.eq.s32.totalorder %s47, 0
    %s50 = sadd.s32 %s49, 1
    %s51 = scalar_select %p48, %s49, %s50
    %p54 = pneg %p48
    %p55 = scmp.eq.s32.totalorder %s9, 31
    %p56 = por %p54, %p55
    %p57 = scmp.ne.s32.totalorder %s49, %s52
    %p58 = scmp.eq.s32.totalorder %s9, 0
    %p59 = por %p57, %p58
    %p60 = scmp.ne.s32.totalorder %s49, %s52
    %p61 = scmp.eq.s32.totalorder %s14, 31
    %p62 = por %p60, %p61
    %p63 = scmp.ne.s32.totalorder %s52, %s53
    %p64 = scmp.eq.s32.totalorder %s14, 0
    %p65 = por %p63, %p64
    %p66 = scmp.ne.s32.totalorder %s52, %s53
    %p67 = scmp.eq.s32.totalorder %s15, 31
    %p68 = por %p66, %p67
    %p70 = scmp.ne.s32.totalorder %s53, %s69
    %p71 = scmp.eq.s32.totalorder %s15, 0
    %p72 = por %p70, %p71
    %p73 = scmp.lt.s32.totalorder %s19, %s18
    %s74 = scalar_select %p73, %s19, %s18
    %p75 = scmp.lt.s32.totalorder %s30, %s34
    %s76 = scalar_select %p75, %s30, %s34
    %s77 = ssub.s32 %s16, %s42
    %s78 = ssub.s32 %s17, %s38
    %s79 = sor.u32 %s77, %s78
    %s80 = ssub.s32 %s74, %s76
    %s81 = sor.u32 %s79, %s80
    %p82 = scmp.eq.s32.totalorder %s81, 0
    %s84 = sadd.s32 %s83, 1
    %s85 = scalar_select %p82, %s83, %s84
    %p88 = pneg %p82
    %p89 = scmp.eq.s32.totalorder %s9, 31
    %p90 = por %p88, %p89
    %p91 = scmp.ne.s32.totalorder %s83, %s86
    %p92 = scmp.eq.s32.totalorder %s9, 0
    %p93 = por %p91, %p92
    %p94 = scmp.ne.s32.totalorder %s83, %s86
    %p95 = scmp.eq.s32.totalorder %s14, 31
    %p96 = por %p94, %p95
    %p97 = scmp.ne.s32.totalorder %s86, %s87
    %p98 = scmp.eq.s32.totalorder %s14, 0
    %p99 = por %p97, %p98
    %p100 = scmp.ne.s32.totalorder %s86, %s87
    %p101 = scmp.eq.s32.totalorder %s15, 31
    %p102 = por %p100, %p101
    %p104 = scmp.ne.s32.totalorder %s87, %s103
    %p105 = scmp.eq.s32.totalorder %s15, 0
    %p106 = por %p104, %p105
    %p107 = scmp.lt.s32.totalorder %s19, %s18
    %s108 = scalar_select %p107, %s19, %s18
    %p109 = scmp.lt.s32.totalorder %s30, %s34
    %s110 = scalar_select %p109, %s30, %s34
    %s111 = ssub.s32 %s16, %s42
    %s112 = ssub.s32 %s17, %s38
    %s113 = sor.u32 %s111, %s112
    %s114 = ssub.s32 %s108, %s110
    %s115 = sor.u32 %s113, %s114
    %p116 = scmp.eq.s32.totalorder %s115, 0
    %s118 = sadd.s32 %s117, 1
    %s119 = scalar_select %p116, %s117, %s118
    %p122 = pneg %p116
    %p123 = scmp.eq.s32.totalorder %s9, 31
    %p124 = por %p122, %p123
    %p125 = scmp.ne.s32.totalorder %s117, %s120
    %p126 = scmp.eq.s32.totalorder %s9, 0
    %p127 = por %p125, %p126
    %p128 = scmp.ne.s32.totalorder %s117, %s120
    %p129 = scmp.eq.s32.totalorder %s14, 31
    %p130 = por %p128, %p129
    %p131 = scmp.ne.s32.totalorder %s120, %s121
    %p132 = scmp.eq.s32.totalorder %s14, 0
    %p133 = por %p131, %p132
    %p134 = scmp.ne.s32.totalorder %s120, %s121
    %p135 = scmp.eq.s32.totalorder %s15, 31
    %p136 = por %p134, %p135
    %p138 = scmp.ne.s32.totalorder %s121, %s137
    %p139 = scmp.eq.s32.totalorder %s15, 0
    %p140 = por %p138, %p139
    %s141 = ssub.s32 %s16, %s42
    %s142 = ssub.s32 %s17, %s38
    %s143 = sor.u32 %s141, %s142
    %s144 = ssub.s32 %s18, %s34
    %s145 = sor.u32 %s143, %s144
    %p146 = scmp.eq.s32.totalorder %s145, 0
    %s148 = sadd.s32 %s147, 1
    %s149 = scalar_select %p146, %s147, %s148
    %p152 = pneg %p146
    %p153 = scmp.eq.s32.totalorder %s9, 31
    %p154 = por %p152, %p153
    %p155 = scmp.ne.s32.totalorder %s147, %s150
    %p156 = scmp.eq.s32.totalorder %s9, 0
    %p157 = por %p155, %p156
    %p158 = scmp.ne.s32.totalorder %s147, %s150
    %p159 = scmp.eq.s32.totalorder %s14, 31
    %p160 = por %p158, %p159
    %p161 = scmp.ne.s32.totalorder %s150, %s151
    %p162 = scmp.eq.s32.totalorder %s14, 0
    %p163 = por %p161, %p162
    %p164 = scmp.ne.s32.totalorder %s150, %s151
    %p165 = scmp.eq.s32.totalorder %s15, 31
    %p166 = por %p164, %p165
    %p168 = scmp.ne.s32.totalorder %s151, %s167
    %p169 = scmp.eq.s32.totalorder %s15, 0
    %p170 = por %p168, %p169
    %p171 = scmp.le.s32.totalorder 1, %s9
    %p172 = scmp.lt.s32.totalorder %s9, 33
    %p173 = pnand %p171, %p172
    %p174 = pneg %p173
    // Predicated region
    $region9: #{gpt2_block.4} parent=5 // pred_check
      _
    $region10: #{gpt2_block.4} parent=5 // pred_check_branch
      %176 = sbr.rel (%p173) target = $region12
    $region11: #{gpt2_block.4} parent=5 // pred_region
      %s177 = ssub.s32 %s9, 1
    $region12: #{gpt2_block.4} parent=5 // pred_fallthru
      _
    %p178 = scmp.lt.s32.totalorder %s9, 32
    // Predicated region
    $region13: #{gpt2_block.4} parent=5 // pred_check
      %p179 = pneg %p178
    $region14: #{gpt2_block.4} parent=5 // pred_check_branch
      %181 = sbr.rel (%p179) target = $region16
    $region15: #{gpt2_block.4} parent=5 // pred_region
      // Predicated region
      $region17: #{gpt2_block.4} parent=15 // pred_check
        %p182 = pneg %p59
      $region18: #{gpt2_block.4} parent=15 // pred_check_branch
        %184 = sbr.rel (%p182) target = $region20
      $region19: #{gpt2_block.4} parent=15 // pred_region
        %p185 = scmp.lt.s32.totalorder %s16, 1
        %s186 = scalar_select %p185, %s16, 1
        %p187 = scmp.lt.s32.totalorder %s17, 3
        %s188 = scalar_select %p187, %s17, 3
        %p189 = scmp.lt.s32.totalorder %s18, 1
        %s190 = scalar_select %p189, %s18, 1
        %s191 = smul.addr %s188, 2
        %s192 = sadd.s32 %s190, %s191
        %s193 = smul.addr %s186, 8
        %s194 = sadd.s32 %s192, %s193
        %s195 = smul.addr %s194, 4
        %s196 = scalar_lea.vmem %s0, %s195
      $region20: #{gpt2_block.4} parent=15 // pred_fallthru
        _
      // Predicated region
      $region21: #{gpt2_block.4} parent=15 // pred_check
        %p197 = pneg %p93
      $region22: #{gpt2_block.4} parent=15 // pred_check_branch
        %199 = sbr.rel (%p197) target = $region24
      $region23: #{gpt2_block.4} parent=15 // pred_region
        %p200 = scmp.lt.s32.totalorder %s19, %s18
        %s201 = scalar_select %p200, %s19, %s18
        %p202 = scmp.lt.s32.totalorder %s16, 1
        %s203 = scalar_select %p202, %s16, 1
        %p204 = scmp.lt.s32.totalorder %s17, 3
        %s205 = scalar_select %p204, %s17, 3
        %p206 = scmp.lt.s32.totalorder %s201, 1
        %s207 = scalar_select %p206, %s201, 1
        %s208 = smul.addr %s205, 2
        %s209 = sadd.s32 %s207, %s208
        %s210 = smul.addr %s203, 8
        %s211 = sadd.s32 %s209, %s210
        %s212 = smul.addr %s211, 4
        %s213 = scalar_lea.vmem %s1, %s212
        %p214 = scmp.lt.s32.totalorder %s19, %s18
        %s215 = scalar_select %p214, %s19, %s18
      $region24: #{gpt2_block.4} parent=15 // pred_fallthru
        _
      // Predicated region
      $region25: #{gpt2_block.4} parent=15 // pred_check
        %p216 = pneg %p127
      $region26: #{gpt2_block.4} parent=15 // pred_check_branch
        %218 = sbr.rel (%p216) target = $region28
      $region27: #{gpt2_block.4} parent=15 // pred_region
        %p219 = scmp.lt.s32.totalorder %s19, %s18
        %s220 = scalar_select %p219, %s19, %s18
        %p221 = scmp.lt.s32.totalorder %s16, 1
        %s222 = scalar_select %p221, %s16, 1
        %p223 = scmp.lt.s32.totalorder %s17, 3
        %s224 = scalar_select %p223, %s17, 3
        %p225 = scmp.lt.s32.totalorder %s220, 1
        %s226 = scalar_select %p225, %s220, 1
        %s227 = smul.addr %s224, 2
        %s228 = sadd.s32 %s226, %s227
        %s229 = smul.addr %s222, 8
        %s230 = sadd.s32 %s228, %s229
        %s231 = smul.addr %s230, 4
        %s232 = scalar_lea.vmem %s2, %s231
        %p233 = scmp.lt.s32.totalorder %s19, %s18
        %s234 = scalar_select %p233, %s19, %s18
      $region28: #{gpt2_block.4} parent=15 // pred_fallthru
        _
    $region16: #{gpt2_block.4} parent=5 // pred_fallthru
      _
    %p235 = scmp.le.s32.totalorder 1, %s9
    %p236 = scmp.lt.s32.totalorder %s9, 33
    %p237 = pnand %p235, %p236
    %p238 = pneg %p237
    // Predicated region
    $region29: #{gpt2_block.4} parent=5 // pred_check
      _
    $region30: #{gpt2_block.4} parent=5 // pred_check_branch
      %240 = sbr.rel (%p237) target = $region32
    $region31: #{gpt2_block.4} parent=5 // pred_region
      %s241 = ssub.s32 %s9, 1
      %p242 = scmp.lt.s32.totalorder %s20, 1
      %s243 = scalar_select %p242, %s20, 1
      %p244 = scmp.lt.s32.totalorder %s21, 3
      %s245 = scalar_select %p244, %s21, 3
      %p246 = scmp.lt.s32.totalorder %s22, 1
      %s247 = scalar_select %p246, %s22, 1
      %s248 = smul.addr %s245, 2
      %s249 = sadd.s32 %s247, %s248
      %s250 = smul.addr %s243, 8
      %s251 = sadd.s32 %s249, %s250
      %s252 = smul.addr %s251, 4
      %s253 = scalar_lea.vmem %s0, %s252
      %p254 = pneg %p65
      %p255 = pneg %p62
      %p256 = scmp.lt.s32.totalorder %s23, %s22
      %s257 = scalar_select %p256, %s23, %s22
      %p258 = scmp.lt.s32.totalorder %s20, 1
      %s259 = scalar_select %p258, %s20, 1
      %p260 = scmp.lt.s32.totalorder %s21, 3
      %s261 = scalar_select %p260, %s21, 3
      %p262 = scmp.lt.s32.totalorder %s257, 1
      %s263 = scalar_select %p262, %s257, 1
      %s264 = smul.addr %s261, 2
      %s265 = sadd.s32 %s263, %s264
      %s266 = smul.addr %s259, 8
      %s267 = sadd.s32 %s265, %s266
      %s268 = smul.addr %s267, 4
      %s269 = scalar_lea.vmem %s1, %s268
      %p270 = pneg %p99
      %p271 = pneg %p96
      %p272 = scmp.lt.s32.totalorder %s23, %s22
      %s273 = scalar_select %p272, %s23, %s22
      %p274 = scmp.lt.s32.totalorder %s20, 1
      %s275 = scalar_select %p274, %s20, 1
      %p276 = scmp.lt.s32.totalorder %s21, 3
      %s277 = scalar_select %p276, %s21, 3
      %p278 = scmp.lt.s32.totalorder %s273, 1
      %s279 = scalar_select %p278, %s273, 1
      %s280 = smul.addr %s277, 2
      %s281 = sadd.s32 %s279, %s280
      %s282 = smul.addr %s275, 8
      %s283 = sadd.s32 %s281, %s282
      %s284 = smul.addr %s283, 4
      %s285 = scalar_lea.vmem %s2, %s284
      %p286 = pneg %p133
      %p287 = pneg %p130
      %p288 = pneg %p163
      %p289 = pneg %p160
      %p290 = scmp.lt.s32.totalorder %s20, 1
      %s291 = scalar_select %p290, %s20, 1
      %p292 = scmp.lt.s32.totalorder %s21, 3
      %s293 = scalar_select %p292, %s21, 3
      %p294 = scmp.lt.s32.totalorder %s22, 1
      %s295 = scalar_select %p294, %s22, 1
      %s296 = smul.addr %s293, 2
      %s297 = sadd.s32 %s295, %s296
      %s298 = smul.addr %s291, 8
      %s299 = sadd.s32 %s297, %s298
      %s300 = smul.addr %s299, 4
      %s301 = scalar_lea.vmem %s3, %s300
      %p302 = scmp.lt.s32.totalorder %s20, 1
      %s303 = scalar_select %p302, %s20, 1
      %p304 = scmp.lt.s32.totalorder %s21, 3
      %s305 = scalar_select %p304, %s21, 3
      %p306 = scmp.lt.s32.totalorder %s22, 1
      %s307 = scalar_select %p306, %s22, 1
      %s308 = smul.addr %s305, 2
      %s309 = sadd.s32 %s307, %s308
      %s310 = smul.addr %s303, 8
      %s311 = sadd.s32 %s309, %s310
      %s312 = smul.addr %s311, 4
      %s313 = scalar_lea.vmem %s0, %s312
      %p314 = scmp.lt.s32.totalorder %s23, %s22
      %s315 = scalar_select %p314, %s23, %s22
      %p316 = scmp.lt.s32.totalorder %s20, 1
      %s317 = scalar_select %p316, %s20, 1
      %p318 = scmp.lt.s32.totalorder %s21, 3
      %s319 = scalar_select %p318, %s21, 3
      %p320 = scmp.lt.s32.totalorder %s315, 1
      %s321 = scalar_select %p320, %s315, 1
      %s322 = smul.addr %s319, 2
      %s323 = sadd.s32 %s321, %s322
      %s324 = smul.addr %s317, 8
      %s325 = sadd.s32 %s323, %s324
      %s326 = smul.addr %s325, 4
      %s327 = scalar_lea.vmem %s1, %s326
      %p328 = scmp.lt.s32.totalorder %s23, %s22
      %s329 = scalar_select %p328, %s23, %s22
      %p330 = scmp.lt.s32.totalorder %s23, %s22
      %s331 = scalar_select %p330, %s23, %s22
      %p332 = scmp.lt.s32.totalorder %s20, 1
      %s333 = scalar_select %p332, %s20, 1
      %p334 = scmp.lt.s32.totalorder %s21, 3
      %s335 = scalar_select %p334, %s21, 3
      %p336 = scmp.lt.s32.totalorder %s331, 1
      %s337 = scalar_select %p336, %s331, 1
      %s338 = smul.addr %s335, 2
      %s339 = sadd.s32 %s337, %s338
      %s340 = smul.addr %s333, 8
      %s341 = sadd.s32 %s339, %s340
      %s342 = smul.addr %s341, 4
      %s343 = scalar_lea.vmem %s2, %s342
      %p344 = scmp.lt.s32.totalorder %s23, %s22
      %s345 = scalar_select %p344, %s23, %s22
      %p346 = scmp.lt.s32.totalorder %s20, 1
      %s347 = scalar_select %p346, %s20, 1
      %p348 = scmp.lt.s32.totalorder %s21, 3
      %s349 = scalar_select %p348, %s21, 3
      %p350 = scmp.lt.s32.totalorder %s22, 1
      %s351 = scalar_select %p350, %s22, 1
      %s352 = smul.addr %s349, 2
      %s353 = sadd.s32 %s351, %s352
      %s354 = smul.addr %s347, 8
      %s355 = sadd.s32 %s353, %s354
      %s356 = smul.addr %s355, 4
      %s357 = scalar_lea.vmem %s3, %s356
      %p359 = scmp.eq.s32.totalorder %s23, 0
      // Predicated region
      $region33: #{gpt2_block.4} parent=31 // pred_check
        %p360 = pneg %p359
      $region34: #{gpt2_block.4} parent=31 // pred_check_branch
        %362 = sbr.rel (%p360) target = $region36
      $region35: #{gpt2_block.4} parent=31 // pred_region
        %vm363 = vcmask 7168
        %364 = vst.msk [vmem:[#allocation2] sm:$0xff] %vm363, -inf
        %365 = vst.msk [vmem:[#allocation3] sm:$0xff] %vm363, 0.0
        %vm366 = vcmask 261120
        %367 = vst.msk [vmem:[#allocation4] sm:$0xff] %vm366, 0.0
      $region36: #{gpt2_block.4} parent=31 // pred_fallthru
        _
      %p368 = scmp.le.s32.totalorder %s23, %s22
      // Predicated region
      $region37: #{gpt2_block.4} parent=31 // pred_check
        %p369 = pneg %p368
      $region38: #{gpt2_block.4} parent=31 // pred_check_branch
        %371 = sbr.rel (%p369) target = $region40
      $region39: #{gpt2_block.4} parent=31 // pred_region
        %v372 = vld [vmem:[%s313] sm:$0xf]
        %v373 = vld [vmem:[%s327] sm:$0xf]
        %v374 = vld [vmem:[%s343] sm:$0xf]
        %vm375 = vcmask 261120
        %v377 = vsel %vm375, %v372, 0
        %v380 = vsel %vm375, %v373, 0
        %382 = vmatprep.subr.bf16.mxu0 0
        %383 = vmatpush1.bf16.xpose.msra.mxu0 %v380
        %384 = vmatprep.subr.bf16.mxu0 0
        %385 = vmatpush1.bf16.xpose.msra.mxu0 0
        %386 = vmatprep.subr.bf16.mxu0 0
        %387 = vmatpush1.bf16.xpose.msra.mxu0 0
        %388 = vmatprep.subr.bf16.mxu0 0
        %389 = vmatpush1.bf16.xpose.msra.mxu0 0
        %390 = vmatprep.subr.bf16.mxu0 0
        %391 = vmatpush1.bf16.xpose.msra.mxu0 0
        %392 = vmatprep.subr.bf16.mxu0 0
        %393 = vmatpush1.bf16.xpose.msra.mxu0 0
        %394 = vmatprep.subr.bf16.mxu0 0
        %395 = vmatpush1.bf16.xpose.msra.mxu0 0
        %396 = vmatprep.subr.bf16.mxu0 0
        %397 = vmatpush1.bf16.xpose.msra.mxu0 0
        %398 = vmatprep.subr.bf16.mxu0 0
        %399 = vmatpush1.bf16.xpose.msra.mxu0 0
        %400 = vmatprep.subr.bf16.mxu0 0
        %401 = vmatpush1.bf16.xpose.msra.mxu0 0
        %402 = vmatprep.subr.bf16.mxu0 0
        %403 = vmatpush1.bf16.xpose.msra.mxu0 0
        %404 = vmatprep.subr.bf16.mxu0 0
        %405 = vmatpush1.bf16.xpose.msra.mxu0 0
        %406 = vmatprep.subr.bf16.mxu0 0
        %407 = vmatpush1.bf16.xpose.msra.mxu0 0
        %408 = vmatprep.subr.bf16.mxu0 0
        %409 = vmatpush1.bf16.xpose.msra.mxu0 0
        %410 = vmatprep.subr.bf16.mxu0 0
        %411 = vmatpush1.bf16.xpose.msra.mxu0 0
        %412 = vmatprep.subr.bf16.mxu0 0
        %413 = vmatpush1.bf16.xpose.msra.mxu0 0
        %414 = vmatprep.mubr.bf16.mxu0 0
        %415 = vmatmul.mubr.bf16.gmra.mrb[0].mxu0 %v377
        %v416 = vpop.f32.mrb[0].mxu0
        %v417 = vadd.f32 0.0, %v416
        %v418 = vpop.f32.mrb[0].mxu0
        %v419 = vpop.f32.mrb[0].mxu0
        %v420 = vpop.f32.mrb[0].mxu0
        %421 = vdwg.mxu0
        %v422 = vmul.f32 %v417, 0.17677669
        %s423 = smul.u32 %s22, 8
        %v424 = vlaneseq
        %v425 = vshrl.u32 %v424, 7
        %v426 = vstv %s423
        %v427 = vadd.s32 %v426, %v425
        %s428 = smul.u32 %s23, 8
        %v429 = vlaneseq
        %v430 = vand.u32 %v429, 127
        %v431 = vstv %s428
        %v432 = vadd.s32 %v431, %v430
        %vm433 = vcmp.ge.s32.totalorder %v427, %v432
        %v434 = vsel %vm433, %v422, -1e+30
        %v435 = vld [vmem:[#allocation2] sm:$0xff]
        %vm436 = vcmask 64512
        %v437 = vsel %vm436, %v434, -inf
        %438 = vmax.xlane.f32.xlu0 %v437
        %v439 = vpop.xlane.xlu0 %438
        %v440 = vmax.f32 %v435, %v439
        %v441 = vsub.f32 %v435, %v440
        %v442 = vmul.f32 %v441, 1.442695
        %v443 = vpow.pop %v442
        %445 = vset.pattern.permute.xlu0 0
        %446 = vperm.xlu0 %445, %v440
        %v447 = vpop.permute.xlu0 %446
        %v449 = vsub.f32 %v434, %v447
        %v450 = vmul.f32 %v449, 1.442695
        %v451 = vpow.pop %v450
        %v452 = vld [vmem:[#allocation3] sm:$0xff]
        %v453 = vmul.f32 %v443, %v452
        %v454 = vsel %vm436, %v451, 0.0
        %455 = vadd.xlane.f32.xlu0 %v454
        %v456 = vpop.xlane.xlu0 %455
        %v457 = vadd.f32 %v453, %v456
        %vm458 = vcmask 7168
        %459 = vst.msk [vmem:[#allocation3] sm:$0xff] %vm458, %v457
        %v460 = vld [vmem:[#allocation4] sm:$0xff]
        %462 = vset.pattern.permute.xlu0 0
        %463 = vperm.xlu0 %462, %v443
        %v464 = vpop.permute.xlu0 %463
        %v466 = vmul.f32 %v464, %v460
        %v467 = vpack.c.bf16 %v451, %v451
        %v469 = vsel %vm436, %v467, 0
        %vm471 = vcmask 1043456
        %v473 = vsel %vm471, %v374, 0
        %475 = vmatprep.subr.bf16.mxu0 0
        %476 = vmatpush1.bf16.msra.mxu0 %v473
        %477 = vmatprep.subr.bf16.mxu0 0
        %478 = vmatpush1.bf16.msra.mxu0 0
        %479 = vmatprep.subr.bf16.mxu0 0
        %480 = vmatpush1.bf16.msra.mxu0 0
        %481 = vmatprep.subr.bf16.mxu0 0
        %482 = vmatpush1.bf16.msra.mxu0 0
        %483 = vmatprep.subr.bf16.mxu0 0
        %484 = vmatpush1.bf16.msra.mxu0 0
        %485 = vmatprep.subr.bf16.mxu0 0
        %486 = vmatpush1.bf16.msra.mxu0 0
        %487 = vmatprep.subr.bf16.mxu0 0
        %488 = vmatpush1.bf16.msra.mxu0 0
        %489 = vmatprep.subr.bf16.mxu0 0
        %490 = vmatpush1.bf16.msra.mxu0 0
        %491 = vmatprep.subr.bf16.mxu0 0
        %492 = vmatpush1.bf16.msra.mxu0 0
        %493 = vmatprep.subr.bf16.mxu0 0
        %494 = vmatpush1.bf16.msra.mxu0 0
        %495 = vmatprep.subr.bf16.mxu0 0
        %496 = vmatpush1.bf16.msra.mxu0 0
        %497 = vmatprep.subr.bf16.mxu0 0
        %498 = vmatpush1.bf16.msra.mxu0 0
        %499 = vmatprep.subr.bf16.mxu0 0
        %500 = vmatpush1.bf16.msra.mxu0 0
        %501 = vmatprep.subr.bf16.mxu0 0
        %502 = vmatpush1.bf16.msra.mxu0 0
        %503 = vmatprep.subr.bf16.mxu0 0
        %504 = vmatpush1.bf16.msra.mxu0 0
        %505 = vmatprep.subr.bf16.mxu0 0
        %506 = vmatpush1.bf16.msra.mxu0 0
        %507 = vmatprep.mubr.bf16.mxu0 0
        %508 = vmatmul.mubr.bf16.gmra.mrb[0].mxu0 %v469
        %v509 = vpop.f32.mrb[0].mxu0
        %v510 = vadd.f32 0.0, %v509
        %v511 = vpop.f32.mrb[0].mxu0
        %v512 = vpop.f32.mrb[0].mxu0
        %v513 = vpop.f32.mrb[0].mxu0
        %514 = vdwg.mxu0
        %v515 = vadd.f32 %v466, %v510
        %516 = vst.msk [vmem:[#allocation4] sm:$0xff] %vm375, %v515
        %517 = vst.msk [vmem:[#allocation2] sm:$0xff] %vm458, %v440
      $region40: #{gpt2_block.4} parent=31 // pred_fallthru
        _
      %p518 = scmp.eq.s32.totalorder %s23, 1
      // Predicated region
      $region41: #{gpt2_block.4} parent=31 // pred_check
        %p519 = pneg %p518
      $region42: #{gpt2_block.4} parent=31 // pred_check_branch
        %521 = sbr.rel (%p519) target = $region44
      $region43: #{gpt2_block.4} parent=31 // pred_region
        %v522 = vld [vmem:[#allocation3] sm:$0xff]
        %v523 = vrcp.pop %v522
        %v524 = vld [vmem:[#allocation4] sm:$0xff]
        %526 = vset.pattern.permute.xlu0 0
        %527 = vperm.xlu0 %526, %v523
        %v528 = vpop.permute.xlu0 %527
        %v530 = vmul.f32 %v524, %v528
        %v531 = vpack.c.bf16 %v530, %v530
        %vm532 = vcmask 257024
        %533 = vst.msk [vmem:[%s357] sm:$0xf] %vm532, %v531
      $region44: #{gpt2_block.4} parent=31 // pred_fallthru
        _
      %p534 = scmp.lt.s32.totalorder %s20, 1
      %s535 = scalar_select %p534, %s20, 1
      %p536 = scmp.lt.s32.totalorder %s21, 3
      %s537 = scalar_select %p536, %s21, 3
      %p538 = scmp.lt.s32.totalorder %s22, 1
      %s539 = scalar_select %p538, %s22, 1
      %s540 = smul.addr %s537, 2
      %s541 = sadd.s32 %s539, %s540
      %s542 = smul.addr %s535, 8
      %s543 = sadd.s32 %s541, %s542
      %s544 = smul.addr %s543, 4
      %s545 = scalar_lea.vmem %s3, %s544
      // Predicated region
      $region45: #{gpt2_block.4} parent=31 // pred_check
        %p546 = pneg %p160
      $region46: #{gpt2_block.4} parent=31 // pred_check_branch
        %548 = sbr.rel (%p546) target = $region48
      $region47: #{gpt2_block.4} parent=31 // pred_region
        _
      $region48: #{gpt2_block.4} parent=31 // pred_fallthru
        _
    $region32: #{gpt2_block.4} parent=5 // pred_fallthru
      _
    %p549 = scmp.le.s32.totalorder 2, %s9
    // Predicated region
    $region49: #{gpt2_block.4} parent=5 // pred_check
      %p550 = pneg %p549
    $region50: #{gpt2_block.4} parent=5 // pred_check_branch
      %552 = sbr.rel (%p550) target = $region52
    $region51: #{gpt2_block.4} parent=5 // pred_region
      %s553 = ssub.s32 %s9, 2
      // Predicated region
      $region53: #{gpt2_block.4} parent=51 // pred_check
        %p554 = pneg %p166
      $region54: #{gpt2_block.4} parent=51 // pred_check_branch
        %556 = sbr.rel (%p554) target = $region56
      $region55: #{gpt2_block.4} parent=51 // pred_region
        %p557 = scmp.lt.s32.totalorder %s24, 1
        %s558 = scalar_select %p557, %s24, 1
        %p559 = scmp.lt.s32.totalorder %s25, 3
        %s560 = scalar_select %p559, %s25, 3
        %p561 = scmp.lt.s32.totalorder %s26, 1
        %s562 = scalar_select %p561, %s26, 1
        %s563 = smul.addr %s560, 2
        %s564 = sadd.s32 %s562, %s563
        %s565 = smul.addr %s558, 8
        %s566 = sadd.s32 %s564, %s565
        %s567 = smul.addr %s566, 4
        %s568 = scalar_lea.vmem %s3, %s567
      $region56: #{gpt2_block.4} parent=51 // pred_fallthru
        _
    $region52: #{gpt2_block.4} parent=5 // pred_fallthru
      _
  $region6: #{gpt2_block.4} parent=0 // loop_footer
    %s13 = sadd.s32 1, %s9
  $region7: #{gpt2_block.4} parent=0 // loop_footer_branch
    %8 = sbr.rel target = $region3
  $region8: #{gpt2_block.4} parent=0 // loop_exit
    _

// kernel: gpt2_block.5
$region0: #{gpt2_block.5}
  #allocation0 [shape = 'u32[]', space=smem, size = 0x4, offset = 0x4, fixed_abs, tag = 'smem constant byte address 0x4 - core index']
  #allocation1 [shape = 'u32[144,128]{1,0:T(1,128)}', space=vmem, size = 0x12000, scoped, tag = 'internal scratch']
  %s0 = inlined_call_operand.vmem [shape: f32[2,16,128], index: 0, kind: input, shape index: {}]
  %s1 = inlined_call_operand.vmem [shape: bf16[2,16,128], index: 1, kind: input, shape index: {}]
  %s2 = inlined_call_operand.vmem [shape: bf16[128,128], index: 2, kind: input, shape index: {}]
  %s3 = inlined_call_operand.vmem [shape: f32[1,128], index: 3, kind: input, shape index: {}]
  %s4 = inlined_call_operand.vmem [shape: f32[1,128], index: 4, kind: input, shape index: {}]
  %s5 = inlined_call_operand.vmem [shape: f32[1,128], index: 5, kind: input, shape index: {}]
  %s6 = inlined_call_operand.vmem [shape: bf16[128,512], index: 6, kind: input, shape index: {}]
  %s7 = inlined_call_operand.vmem [shape: f32[1,512], index: 7, kind: input, shape index: {}]
  %s8 = inlined_call_operand.vmem [shape: bf16[512,128], index: 8, kind: input, shape index: {}]
  %s9 = inlined_call_operand.vmem [shape: f32[1,128], index: 9, kind: input, shape index: {}]
  %s10 = inlined_call_operand.hbm [shape: f32[2,16,128], index: 10, kind: output, shape index: {}]
  %s11 = sld [smem:[#allocation0]]
  $region73: #{gpt2_block.5} parent=0
    _
  %s13 = ssub.s32 1, %s11
  %s14 = scalar_select 0, %s13, %s11
  $region1: #{gpt2_block.5} parent=0
    #allocation2 [shape = 'u8[8192]{0}', space=vmem, size = 0x2000, scoped, tag = 'output window, operand 0']
    #allocation3 [shape = 's32[2]{0}', space=sflag, size = 0x8, scoped, tag = 'scoped memory for gpt2_block.5']
    %15 = vsyncpa [#allocation3], 0
    %s16 = scalar_lea.sflag [#allocation3], 1
    %17 = vsyncpa %s16, 0
    loop: start=0, step=1, limit=6
    $region2: #{gpt2_block.5} parent=1 // loop_pre_header
      _
    $region3: #{gpt2_block.5} parent=1 // loop_header
      %s19 = sphi 0, %s23
      %p20 = scmp.ge.s32.totalorder %s19, 6
      %s26 = sphi 0, %s38
      %s27 = sphi 0, %s34
      %s28 = sphi 0, %s26
      %s29 = sphi 0, %s27
      %s30 = sphi 0, %s28
      %s31 = sphi 0, %s29
      %s43 = sphi 0, %s45
      %s46 = sphi 0, %s43
      %s47 = sphi 0, %s46
      %s63 = sphi 0, %s47
      %s71 = sphi 0, %s73
      %s74 = sphi 0, %s71
      %s75 = sphi 0, %s74
      %s91 = sphi 0, %s75
      %s95 = sphi 0, %s95
      %s97 = sphi 0, %s95
      %s98 = sphi 0, %s97
      %s112 = sphi 0, %s98
      %s116 = sphi 0, %s116
      %s118 = sphi 0, %s116
      %s119 = sphi 0, %s118
      %s133 = sphi 0, %s119
      %s137 = sphi 0, %s137
      %s139 = sphi 0, %s137
      %s140 = sphi 0, %s139
      %s154 = sphi 0, %s140
      %s158 = sphi 0, %s158
      %s160 = sphi 0, %s158
      %s161 = sphi 0, %s160
      %s175 = sphi 0, %s161
      %s179 = sphi 0, %s179
      %s181 = sphi 0, %s179
      %s182 = sphi 0, %s181
      %s196 = sphi 0, %s182
      %s200 = sphi 0, %s200
      %s202 = sphi 0, %s200
      %s203 = sphi 0, %s202
      %s217 = sphi 0, %s203
      %s221 = sphi 0, %s221
      %s223 = sphi 0, %s221
      %s224 = sphi 0, %s223
      %s238 = sphi 0, %s224
      %s242 = sphi 0, %s242
      %s244 = sphi 0, %s242
      %s245 = sphi 0, %s244
      %s259 = sphi 0, %s245
      %s267 = sphi 0, %s269
      %s270 = sphi 0, %s267
      %s271 = sphi 0, %s270
      %s287 = sphi 0, %s271
    $region4: #{gpt2_block.5} parent=1 // loop_header_branch
      %22 = sbr.rel (%p20) target = $region8
    $region5: #{gpt2_block.5} parent=1 // loop_body
      %s24 = ssub.s32 %s19, 1
      %s25 = ssub.s32 %s19, 2
      %s32 = sadd.s32 1, %s27
      %p33 = scmp.ge.s32.totalorder %s32, 2
      %s34 = scalar_select %p33, 0, %s32
      %s35 = sadd.s32 1, %s26
      %s36 = scalar_select %p33, %s35, %s26
      %p37 = scmp.ge.s32.totalorder %s36, 2
      %s38 = scalar_select %p37, 0, %s36
      %s39 = ssub.s32 %s26, %s38
      %s40 = ssub.s32 %s27, %s34
      %s41 = sor.u32 %s39, %s40
      %p42 = scmp.eq.s32.totalorder %s41, 0
      %s44 = sadd.s32 %s43, 1
      %s45 = scalar_select %p42, %s43, %s44
      %p48 = pneg %p42
      %p49 = scmp.eq.s32.totalorder %s19, 3
      %p50 = por %p48, %p49
      %p51 = scmp.ne.s32.totalorder %s43, %s46
      %p52 = scmp.eq.s32.totalorder %s19, 0
      %p53 = por %p51, %p52
      %p54 = scmp.ne.s32.totalorder %s43, %s46
      %p55 = scmp.eq.s32.totalorder %s24, 3
      %p56 = por %p54, %p55
      %p57 = scmp.ne.s32.totalorder %s46, %s47
      %p58 = scmp.eq.s32.totalorder %s24, 0
      %p59 = por %p57, %p58
      %p60 = scmp.ne.s32.totalorder %s46, %s47
      %p61 = scmp.eq.s32.totalorder %s25, 3
      %p62 = por %p60, %p61
      %p64 = scmp.ne.s32.totalorder %s47, %s63
      %p65 = scmp.eq.s32.totalorder %s25, 0
      %p66 = por %p64, %p65
      %s67 = ssub.s32 %s26, %s38
      %s68 = ssub.s32 %s27, %s34
      %s69 = sor.u32 %s67, %s68
      %p70 = scmp.eq.s32.totalorder %s69, 0
      %s72 = sadd.s32 %s71, 1
      %s73 = scalar_select %p70, %s71, %s72
      %p76 = pneg %p70
      %p77 = scmp.eq.s32.totalorder %s19, 3
      %p78 = por %p76, %p77
      %p79 = scmp.ne.s32.totalorder %s71, %s74
      %p80 = scmp.eq.s32.totalorder %s19, 0
      %p81 = por %p79, %p80
      %p82 = scmp.ne.s32.totalorder %s71, %s74
      %p83 = scmp.eq.s32.totalorder %s24, 3
      %p84 = por %p82, %p83
      %p85 = scmp.ne.s32.totalorder %s74, %s75
      %p86 = scmp.eq.s32.totalorder %s24, 0
      %p87 = por %p85, %p86
      %p88 = scmp.ne.s32.totalorder %s74, %s75
      %p89 = scmp.eq.s32.totalorder %s25, 3
      %p90 = por %p88, %p89
      %p92 = scmp.ne.s32.totalorder %s75, %s91
      %p93 = scmp.eq.s32.totalorder %s25, 0
      %p94 = por %p92, %p93
      %s96 = sadd.s32 %s95, 1
      %p99 = scmp.eq.s32.totalorder %s19, 3
      %p100 = scmp.ne.s32.totalorder %s95, %s97
      %p101 = scmp.eq.s32.totalorder %s19, 0
      %p102 = por %p100, %p101
      %p103 = scmp.ne.s32.totalorder %s95, %s97
      %p104 = scmp.eq.s32.totalorder %s24, 3
      %p105 = por %p103, %p104
      %p106 = scmp.ne.s32.totalorder %s97, %s98
      %p107 = scmp.eq.s32.totalorder %s24, 0
      %p108 = por %p106, %p107
      %p109 = scmp.ne.s32.totalorder %s97, %s98
      %p110 = scmp.eq.s32.totalorder %s25, 3
      %p111 = por %p109, %p110
      %p113 = scmp.ne.s32.totalorder %s98, %s112
      %p114 = scmp.eq.s32.totalorder %s25, 0
      %p115 = por %p113, %p114
      %s117 = sadd.s32 %s116, 1
      %p120 = scmp.eq.s32.totalorder %s19, 3
      %p121 = scmp.ne.s32.totalorder %s116, %s118
      %p122 = scmp.eq.s32.totalorder %s19, 0
      %p123 = por %p121, %p122
      %p124 = scmp.ne.s32.totalorder %s116, %s118
      %p125 = scmp.eq.s32.totalorder %s24, 3
      %p126 = por %p124, %p125
      %p127 = scmp.ne.s32.totalorder %s118, %s119
      %p128 = scmp.eq.s32.totalorder %s24, 0
      %p129 = por %p127, %p128
      %p130 = scmp.ne.s32.totalorder %s118, %s119
      %p131 = scmp.eq.s32.totalorder %s25, 3
      %p132 = por %p130, %p131
      %p134 = scmp.ne.s32.totalorder %s119, %s133
      %p135 = scmp.eq.s32.totalorder %s25, 0
      %p136 = por %p134, %p135
      %s138 = sadd.s32 %s137, 1
      %p141 = scmp.eq.s32.totalorder %s19, 3
      %p142 = scmp.ne.s32.totalorder %s137, %s139
      %p143 = scmp.eq.s32.totalorder %s19, 0
      %p144 = por %p142, %p143
      %p145 = scmp.ne.s32.totalorder %s137, %s139
      %p146 = scmp.eq.s32.totalorder %s24, 3
      %p147 = por %p145, %p146
      %p148 = scmp.ne.s32.totalorder %s139, %s140
      %p149 = scmp.eq.s32.totalorder %s24, 0
      %p150 = por %p148, %p149
      %p151 = scmp.ne.s32.totalorder %s139, %s140
      %p152 = scmp.eq.s32.totalorder %s25, 3
      %p153 = por %p151, %p152
      %p155 = scmp.ne.s32.totalorder %s140, %s154
      %p156 = scmp.eq.s32.totalorder %s25, 0
      %p157 = por %p155, %p156
      %s159 = sadd.s32 %s158, 1
      %p162 = scmp.eq.s32.totalorder %s19, 3
      %p163 = scmp.ne.s32.totalorder %s158, %s160
      %p164 = scmp.eq.s32.totalorder %s19, 0
      %p165 = por %p163, %p164
      %p166 = scmp.ne.s32.totalorder %s158, %s160
      %p167 = scmp.eq.s32.totalorder %s24, 3
      %p168 = por %p166, %p167
      %p169 = scmp.ne.s32.totalorder %s160, %s161
      %p170 = scmp.eq.s32.totalorder %s24, 0
      %p171 = por %p169, %p170
      %p172 = scmp.ne.s32.totalorder %s160, %s161
      %p173 = scmp.eq.s32.totalorder %s25, 3
      %p174 = por %p172, %p173
      %p176 = scmp.ne.s32.totalorder %s161, %s175
      %p177 = scmp.eq.s32.totalorder %s25, 0
      %p178 = por %p176, %p177
      %s180 = sadd.s32 %s179, 1
      %p183 = scmp.eq.s32.totalorder %s19, 3
      %p184 = scmp.ne.s32.totalorder %s179, %s181
      %p185 = scmp.eq.s32.totalorder %s19, 0
      %p186 = por %p184, %p185
      %p187 = scmp.ne.s32.totalorder %s179, %s181
      %p188 = scmp.eq.s32.totalorder %s24, 3
      %p189 = por %p187, %p188
      %p190 = scmp.ne.s32.totalorder %s181, %s182
      %p191 = scmp.eq.s32.totalorder %s24, 0
      %p192 = por %p190, %p191
      %p193 = scmp.ne.s32.totalorder %s181, %s182
      %p194 = scmp.eq.s32.totalorder %s25, 3
      %p195 = por %p193, %p194
      %p197 = scmp.ne.s32.totalorder %s182, %s196
      %p198 = scmp.eq.s32.totalorder %s25, 0
      %p199 = por %p197, %p198
      %s201 = sadd.s32 %s200, 1
      %p204 = scmp.eq.s32.totalorder %s19, 3
      %p205 = scmp.ne.s32.totalorder %s200, %s202
      %p206 = scmp.eq.s32.totalorder %s19, 0
      %p207 = por %p205, %p206
      %p208 = scmp.ne.s32.totalorder %s200, %s202
      %p209 = scmp.eq.s32.totalorder %s24, 3
      %p210 = por %p208, %p209
      %p211 = scmp.ne.s32.totalorder %s202, %s203
      %p212 = scmp.eq.s32.totalorder %s24, 0
      %p213 = por %p211, %p212
      %p214 = scmp.ne.s32.totalorder %s202, %s203
      %p215 = scmp.eq.s32.totalorder %s25, 3
      %p216 = por %p214, %p215
      %p218 = scmp.ne.s32.totalorder %s203, %s217
      %p219 = scmp.eq.s32.totalorder %s25, 0
      %p220 = por %p218, %p219
      %s222 = sadd.s32 %s221, 1
      %p225 = scmp.eq.s32.totalorder %s19, 3
      %p226 = scmp.ne.s32.totalorder %s221, %s223
      %p227 = scmp.eq.s32.totalorder %s19, 0
      %p228 = por %p226, %p227
      %p229 = scmp.ne.s32.totalorder %s221, %s223
      %p230 = scmp.eq.s32.totalorder %s24, 3
      %p231 = por %p229, %p230
      %p232 = scmp.ne.s32.totalorder %s223, %s224
      %p233 = scmp.eq.s32.totalorder %s24, 0
      %p234 = por %p232, %p233
      %p235 = scmp.ne.s32.totalorder %s223, %s224
      %p236 = scmp.eq.s32.totalorder %s25, 3
      %p237 = por %p235, %p236
      %p239 = scmp.ne.s32.totalorder %s224, %s238
      %p240 = scmp.eq.s32.totalorder %s25, 0
      %p241 = por %p239, %p240
      %s243 = sadd.s32 %s242, 1
      %p246 = scmp.eq.s32.totalorder %s19, 3
      %p247 = scmp.ne.s32.totalorder %s242, %s244
      %p248 = scmp.eq.s32.totalorder %s19, 0
      %p249 = por %p247, %p248
      %p250 = scmp.ne.s32.totalorder %s242, %s244
      %p251 = scmp.eq.s32.totalorder %s24, 3
      %p252 = por %p250, %p251
      %p253 = scmp.ne.s32.totalorder %s244, %s245
      %p254 = scmp.eq.s32.totalorder %s24, 0
      %p255 = por %p253, %p254
      %p256 = scmp.ne.s32.totalorder %s244, %s245
      %p257 = scmp.eq.s32.totalorder %s25, 3
      %p258 = por %p256, %p257
      %p260 = scmp.ne.s32.totalorder %s245, %s259
      %p261 = scmp.eq.s32.totalorder %s25, 0
      %p262 = por %p260, %p261
      %s263 = ssub.s32 %s26, %s38
      %s264 = ssub.s32 %s27, %s34
      %s265 = sor.u32 %s263, %s264
      %p266 = scmp.eq.s32.totalorder %s265, 0
      %s268 = sadd.s32 %s267, 1
      %s269 = scalar_select %p266, %s267, %s268
      %p272 = pneg %p266
      %p273 = scmp.eq.s32.totalorder %s19, 3
      %p274 = por %p272, %p273
      %p275 = scmp.ne.s32.totalorder %s267, %s270
      %p276 = scmp.eq.s32.totalorder %s19, 0
      %p277 = por %p275, %p276
      %p278 = scmp.ne.s32.totalorder %s267, %s270
      %p279 = scmp.eq.s32.totalorder %s24, 3
      %p280 = por %p278, %p279
      %p281 = scmp.ne.s32.totalorder %s270, %s271
      %p282 = scmp.eq.s32.totalorder %s24, 0
      %p283 = por %p281, %p282
      %p284 = scmp.ne.s32.totalorder %s270, %s271
      %p285 = scmp.eq.s32.totalorder %s25, 3
      %p286 = por %p284, %p285
      %p288 = scmp.ne.s32.totalorder %s271, %s287
      %p289 = scmp.eq.s32.totalorder %s25, 0
      %p290 = por %p288, %p289
      %p291 = scmp.le.s32.totalorder 1, %s19
      %p292 = scmp.lt.s32.totalorder %s19, 5
      %p293 = pnand %p291, %p292
      %p294 = pneg %p293
      // Predicated region
      $region9: #{gpt2_block.5} parent=5 // pred_check
        _
      $region10: #{gpt2_block.5} parent=5 // pred_check_branch
        %296 = sbr.rel (%p293) target = $region12
      $region11: #{gpt2_block.5} parent=5 // pred_region
        %s297 = ssub.s32 %s19, 1
        // Predicated region
        $region13: #{gpt2_block.5} parent=11 // pred_check
          %p298 = pneg %p108
        $region14: #{gpt2_block.5} parent=11 // pred_check_branch
          %300 = sbr.rel (%p298) target = $region16
        $region15: #{gpt2_block.5} parent=11 // pred_region
          _
        $region16: #{gpt2_block.5} parent=11 // pred_fallthru
          _
        // Predicated region
        $region17: #{gpt2_block.5} parent=11 // pred_check
          %p301 = pneg %p129
        $region18: #{gpt2_block.5} parent=11 // pred_check_branch
          %303 = sbr.rel (%p301) target = $region20
        $region19: #{gpt2_block.5} parent=11 // pred_region
          _
        $region20: #{gpt2_block.5} parent=11 // pred_fallthru
          _
        // Predicated region
        $region21: #{gpt2_block.5} parent=11 // pred_check
          %p304 = pneg %p150
        $region22: #{gpt2_block.5} parent=11 // pred_check_branch
          %306 = sbr.rel (%p304) target = $region24
        $region23: #{gpt2_block.5} parent=11 // pred_region
          _
        $region24: #{gpt2_block.5} parent=11 // pred_fallthru
          _
        // Predicated region
        $region25: #{gpt2_block.5} parent=11 // pred_check
          %p307 = pneg %p171
        $region26: #{gpt2_block.5} parent=11 // pred_check_branch
          %309 = sbr.rel (%p307) target = $region28
        $region27: #{gpt2_block.5} parent=11 // pred_region
          _
        $region28: #{gpt2_block.5} parent=11 // pred_fallthru
          _
        // Predicated region
        $region29: #{gpt2_block.5} parent=11 // pred_check
          %p310 = pneg %p192
        $region30: #{gpt2_block.5} parent=11 // pred_check_branch
          %312 = sbr.rel (%p310) target = $region32
        $region31: #{gpt2_block.5} parent=11 // pred_region
          _
        $region32: #{gpt2_block.5} parent=11 // pred_fallthru
          _
        // Predicated region
        $region33: #{gpt2_block.5} parent=11 // pred_check
          %p313 = pneg %p213
        $region34: #{gpt2_block.5} parent=11 // pred_check_branch
          %315 = sbr.rel (%p313) target = $region36
        $region35: #{gpt2_block.5} parent=11 // pred_region
          _
        $region36: #{gpt2_block.5} parent=11 // pred_fallthru
          _
        // Predicated region
        $region37: #{gpt2_block.5} parent=11 // pred_check
          %p316 = pneg %p234
        $region38: #{gpt2_block.5} parent=11 // pred_check_branch
          %318 = sbr.rel (%p316) target = $region40
        $region39: #{gpt2_block.5} parent=11 // pred_region
          _
        $region40: #{gpt2_block.5} parent=11 // pred_fallthru
          _
        // Predicated region
        $region41: #{gpt2_block.5} parent=11 // pred_check
          %p319 = pneg %p255
        $region42: #{gpt2_block.5} parent=11 // pred_check_branch
          %321 = sbr.rel (%p319) target = $region44
        $region43: #{gpt2_block.5} parent=11 // pred_region
          _
        $region44: #{gpt2_block.5} parent=11 // pred_fallthru
          _
      $region12: #{gpt2_block.5} parent=5 // pred_fallthru
        _
      %p322 = scmp.lt.s32.totalorder %s19, 4
      // Predicated region
      $region45: #{gpt2_block.5} parent=5 // pred_check
        %p323 = pneg %p322
      $region46: #{gpt2_block.5} parent=5 // pred_check_branch
        %325 = sbr.rel (%p323) target = $region48
      $region47: #{gpt2_block.5} parent=5 // pred_region
        // Predicated region
        $region49: #{gpt2_block.5} parent=47 // pred_check
          %p326 = pneg %p53
        $region50: #{gpt2_block.5} parent=47 // pred_check_branch
          %328 = sbr.rel (%p326) target = $region52
        $region51: #{gpt2_block.5} parent=47 // pred_region
          %p329 = scmp.lt.s32.totalorder %s26, 1
          %s330 = scalar_select %p329, %s26, 1
          %p331 = scmp.lt.s32.totalorder %s27, 1
          %s332 = scalar_select %p331, %s27, 1
          %s333 = smul.addr %s330, 2
          %s334 = sadd.s32 %s332, %s333
          %s335 = smul.addr %s334, 8
          %s336 = scalar_lea.vmem %s0, %s335
        $region52: #{gpt2_block.5} parent=47 // pred_fallthru
          _
        // Predicated region
        $region53: #{gpt2_block.5} parent=47 // pred_check
          %p337 = pneg %p81
        $region54: #{gpt2_block.5} parent=47 // pred_check_branch
          %339 = sbr.rel (%p337) target = $region56
        $region55: #{gpt2_block.5} parent=47 // pred_region
          %p340 = scmp.lt.s32.totalorder %s26, 1
          %s341 = scalar_select %p340, %s26, 1
          %p342 = scmp.lt.s32.totalorder %s27, 1
          %s343 = scalar_select %p342, %s27, 1
          %s344 = smul.addr %s341, 2
          %s345 = sadd.s32 %s343, %s344
          %s346 = smul.addr %s345, 4
          %s347 = scalar_lea.vmem %s1, %s346
        $region56: #{gpt2_block.5} parent=47 // pred_fallthru
          _
      $region48: #{gpt2_block.5} parent=5 // pred_fallthru
        _
      %p348 = scmp.le.s32.totalorder 1, %s19
      %p349 = scmp.lt.s32.totalorder %s19, 5
      %p350 = pnand %p348, %p349
      %p351 = pneg %p350
      // Predicated region
      $region57: #{gpt2_block.5} parent=5 // pred_check
        _
      $region58: #{gpt2_block.5} parent=5 // pred_check_branch
        %353 = sbr.rel (%p350) target = $region60
      $region59: #{gpt2_block.5} parent=5 // pred_region
        %s354 = ssub.s32 %s19, 1
        %p355 = scmp.lt.s32.totalorder %s28, 1
        %s356 = scalar_select %p355, %s28, 1
        %p357 = scmp.lt.s32.totalorder %s29, 1
        %s358 = scalar_select %p357, %s29, 1
        %s359 = smul.addr %s356, 2
        %s360 = sadd.s32 %s358, %s359
        %s361 = smul.addr %s360, 8
        %s362 = scalar_lea.vmem %s0, %s361
        %p363 = pneg %p59
        %p364 = pneg %p56
        %p365 = scmp.lt.s32.totalorder %s28, 1
        %s366 = scalar_select %p365, %s28, 1
        %p367 = scmp.lt.s32.totalorder %s29, 1
        %s368 = scalar_select %p367, %s29, 1
        %s369 = smul.addr %s366, 2
        %s370 = sadd.s32 %s368, %s369
        %s371 = smul.addr %s370, 4
        %s372 = scalar_lea.vmem %s1, %s371
        %p373 = pneg %p87
        %p374 = pneg %p84
        %p375 = pneg %p108
        %p376 = pneg %p105
        %p377 = pneg %p129
        %p378 = pneg %p126
        %p379 = pneg %p150
        %p380 = pneg %p147
        %p381 = pneg %p171
        %p382 = pneg %p168
        %p383 = pneg %p192
        %p384 = pneg %p189
        %p385 = pneg %p213
        %p386 = pneg %p210
        %p387 = pneg %p234
        %p388 = pneg %p231
        %p389 = pneg %p255
        %p390 = pneg %p252
        %p391 = pneg %p283
        %p392 = pneg %p280
        %s393 = sand.u32 %s270, 1
        %s394 = scalar_lea.sflag [#allocation3], %s393
        %s395 = sand.u32 %s270, 1
        %s396 = smul.addr %s395, 8
        %s397 = scalar_lea.vmem [#allocation2], %s396
        %p398 = scmp.lt.s32.totalorder %s28, 1
        %s399 = scalar_select %p398, %s28, 1
        %p400 = scmp.lt.s32.totalorder %s29, 1
        %s401 = scalar_select %p400, %s29, 1
        %s402 = smul.addr %s399, 2
        %s403 = sadd.s32 %s401, %s402
        %s404 = smul.addr %s403, 8
        %s405 = scalar_lea.vmem %s0, %s404
        %p406 = scmp.lt.s32.totalorder %s28, 1
        %s407 = scalar_select %p406, %s28, 1
        %p408 = scmp.lt.s32.totalorder %s29, 1
        %s409 = scalar_select %p408, %s29, 1
        %s410 = smul.addr %s407, 2
        %s411 = sadd.s32 %s409, %s410
        %s412 = smul.addr %s411, 4
        %s413 = scalar_lea.vmem %s1, %s412
        %v415 = vld [vmem:[%s405] sm:$0xff]
        %v416 = vld [vmem:[%s413] sm:$0xf]
        %v417 = vld [vmem:[%s2] sm:$0xf]
        %v418 = vld [vmem:[%s2 + $0x4] sm:$0xf]
        %v419 = vld [vmem:[%s2 + $0x8] sm:$0xf]
        %v420 = vld [vmem:[%s2 + $0xc] sm:$0xf]
        %v421 = vld [vmem:[%s2 + $0x10] sm:$0xf]
        %v422 = vld [vmem:[%s2 + $0x14] sm:$0xf]
        %v423 = vld [vmem:[%s2 + $0x18] sm:$0xf]
        %v424 = vld [vmem:[%s2 + $0x1c] sm:$0xf]
        %v425 = vld [vmem:[%s2 + $0x20] sm:$0xf]
        %v426 = vld [vmem:[%s2 + $0x24] sm:$0xf]
        %v427 = vld [vmem:[%s2 + $0x28] sm:$0xf]
        %v428 = vld [vmem:[%s2 + $0x2c] sm:$0xf]
        %v429 = vld [vmem:[%s2 + $0x30] sm:$0xf]
        %v430 = vld [vmem:[%s2 + $0x34] sm:$0xf]
        %v431 = vld [vmem:[%s2 + $0x38] sm:$0xf]
        %v432 = vld [vmem:[%s2 + $0x3c] sm:$0xf]
        %v449 = vunpack.c.l.b16 %v417
        %v450 = vunpack.c.l.b16 %v418
        %v451 = vunpack.c.l.b16 %v419
        %v452 = vunpack.c.l.b16 %v420
        %v453 = vunpack.c.l.b16 %v421
        %v454 = vunpack.c.l.b16 %v422
        %v455 = vunpack.c.l.b16 %v423
        %v456 = vunpack.c.l.b16 %v424
        %v457 = vunpack.c.l.b16 %v425
        %v458 = vunpack.c.l.b16 %v426
        %v459 = vunpack.c.l.b16 %v427
        %v460 = vunpack.c.l.b16 %v428
        %v461 = vunpack.c.l.b16 %v429
        %v462 = vunpack.c.l.b16 %v430
        %v463 = vunpack.c.l.b16 %v431
        %v464 = vunpack.c.l.b16 %v432
        %v465 = vpack.c.b16 %v450, %v449
        %v466 = vpack.c.b16 %v452, %v451
        %v467 = vpack.c.b16 %v454, %v453
        %v468 = vpack.c.b16 %v456, %v455
        %v469 = vpack.c.b16 %v458, %v457
        %v470 = vpack.c.b16 %v460, %v459
        %v471 = vpack.c.b16 %v462, %v461
        %v472 = vpack.c.b16 %v464, %v463
        %481 = vmatprep.subr.bf16.mxu0 0
        %482 = vmatpush1.bf16.msra.mxu0 %v465
        %483 = vmatprep.subr.bf16.mxu0 0
        %484 = vmatpush1.bf16.msra.mxu0 %v466
        %485 = vmatprep.subr.bf16.mxu0 0
        %486 = vmatpush1.bf16.msra.mxu0 %v467
        %487 = vmatprep.subr.bf16.mxu0 0
        %488 = vmatpush1.bf16.msra.mxu0 %v468
        %489 = vmatprep.subr.bf16.mxu0 0
        %490 = vmatpush1.bf16.msra.mxu0 %v469
        %491 = vmatprep.subr.bf16.mxu0 0
        %492 = vmatpush1.bf16.msra.mxu0 %v470
        %493 = vmatprep.subr.bf16.mxu0 0
        %494 = vmatpush1.bf16.msra.mxu0 %v471
        %495 = vmatprep.subr.bf16.mxu0 0
        %496 = vmatpush1.bf16.msra.mxu0 %v472
        %497 = vmatprep.subr.bf16.mxu0 0
        %498 = vmatpush1.bf16.msra.mxu0 0
        %499 = vmatprep.subr.bf16.mxu0 0
        %500 = vmatpush1.bf16.msra.mxu0 0
        %501 = vmatprep.subr.bf16.mxu0 0
        %502 = vmatpush1.bf16.msra.mxu0 0
        %503 = vmatprep.subr.bf16.mxu0 0
        %504 = vmatpush1.bf16.msra.mxu0 0
        %505 = vmatprep.subr.bf16.mxu0 0
        %506 = vmatpush1.bf16.msra.mxu0 0
        %507 = vmatprep.subr.bf16.mxu0 0
        %508 = vmatpush1.bf16.msra.mxu0 0
        %509 = vmatprep.subr.bf16.mxu0 0
        %510 = vmatpush1.bf16.msra.mxu0 0
        %511 = vmatprep.subr.bf16.mxu0 0
        %512 = vmatpush1.bf16.msra.mxu0 0
        %513 = vmatprep.mubr.bf16.mxu0 0
        %514 = vmatmul.mubr.bf16.gmra.mrb[0].mxu0 %v416
        %v515 = vpop.f32.mrb[0].mxu0
        %v516 = vadd.f32 0.0, %v515
        %v517 = vpop.f32.mrb[0].mxu0
        %v518 = vpop.f32.mrb[0].mxu0
        %v519 = vpop.f32.mrb[0].mxu0
        %520 = vdwg.mxu0
        %v521 = vadd.f32 %v415, %v516
        %v522 = vld [vmem:[%s3] sm:$0x1]
        %v524 = vlaneseq
        %v525 = vshrl.u32 %v524, 7
        %v526 = vsub.s32 0, %v525
        %v527 = vrot.slane %v522, %v526
        %v529 = vadd.f32 %v521, %v527
        %v530 = vld [vmem:[%s4] sm:$0x1]
        %v531 = vld [vmem:[%s5] sm:$0x1]
        %532 = vadd.xlane.f32.xlu0 %v529
        %v533 = vpop.xlane.xlu0 %532
        %v534 = vrcp.pop 128.0
        %v535 = vmul.f32 %v533, %v534
        %v536 = vsub.f32 %v529, %v535
        %v537 = vmul.f32 %v536, %v536
        %538 = vadd.xlane.f32.xlu0 %v537
        %v539 = vpop.xlane.xlu0 %538
        %v540 = vmul.f32 %v539, %v534
        %v541 = vadd.f32 %v540, 1e-05
        %v542 = vrsqrt.pop %v541
        %v543 = vmul.f32 %v536, %v542
        %v545 = vlaneseq
        %v546 = vshrl.u32 %v545, 7
        %v547 = vsub.s32 0, %v546
        %v548 = vrot.slane %v530, %v547
        %v550 = vmul.f32 %v543, %v548
        %v552 = vlaneseq
        %v553 = vshrl.u32 %v552, 7
        %v554 = vsub.s32 0, %v553
        %v555 = vrot.slane %v531, %v554
        %v557 = vadd.f32 %v550, %v555
        %v558 = vpack.c.bf16 %v557, %v557
        %v559 = vld [vmem:[%s6] sm:$0xff]
        %v560 = vld [vmem:[%s6 + $0x8] sm:$0xff]
        %v561 = vld [vmem:[%s6 + $0x10] sm:$0xff]
        %v562 = vld [vmem:[%s6 + $0x18] sm:$0xff]
        %v563 = vld [vmem:[%s6 + $0x20] sm:$0xff]
        %v564 = vld [vmem:[%s6 + $0x28] sm:$0xff]
        %v565 = vld [vmem:[%s6 + $0x30] sm:$0xff]
        %v566 = vld [vmem:[%s6 + $0x38] sm:$0xff]
        %v567 = vld [vmem:[%s6 + $0x40] sm:$0xff]
        %v568 = vld [vmem:[%s6 + $0x48] sm:$0xff]
        %v569 = vld [vmem:[%s6 + $0x50] sm:$0xff]
        %v570 = vld [vmem:[%s6 + $0x58] sm:$0xff]
        %v571 = vld [vmem:[%s6 + $0x60] sm:$0xff]
        %v572 = vld [vmem:[%s6 + $0x68] sm:$0xff]
        %v573 = vld [vmem:[%s6 + $0x70] sm:$0xff]
        %v574 = vld [vmem:[%s6 + $0x78] sm:$0xff]
        %v575 = vld [vmem:[%s6 + $0x80] sm:$0xff]
        %v576 = vld [vmem:[%s6 + $0x88] sm:$0xff]
        %v577 = vld [vmem:[%s6 + $0x90] sm:$0xff]
        %v578 = vld [vmem:[%s6 + $0x98] sm:$0xff]
        %v579 = vld [vmem:[%s6 + $0xa0] sm:$0xff]
        %v580 = vld [vmem:[%s6 + $0xa8] sm:$0xff]
        %v581 = vld [vmem:[%s6 + $0xb0] sm:$0xff]
        %v582 = vld [vmem:[%s6 + $0xb8] sm:$0xff]
        %v583 = vld [vmem:[%s6 + $0xc0] sm:$0xff]
        %v584 = vld [vmem:[%s6 + $0xc8] sm:$0xff]
        %v585 = vld [vmem:[%s6 + $0xd0] sm:$0xff]
        %v586 = vld [vmem:[%s6 + $0xd8] sm:$0xff]
        %v587 = vld [vmem:[%s6 + $0xe0] sm:$0xff]
        %v588 = vld [vmem:[%s6 + $0xe8] sm:$0xff]
        %v589 = vld [vmem:[%s6 + $0xf0] sm:$0xff]
        %v590 = vld [vmem:[%s6 + $0xf8] sm:$0xff]
        %v591 = vld [vmem:[%s7] sm:$0xf]
        %v593 = vlaneseq
        %v594 = vshrl.u32 %v593, 7
        %v595 = vsub.s32 0, %v594
        %v596 = vrot.slane %v591, %v595
        %v597 = vlaneseq
        %v598 = vshrl.u32 %v597, 7
        %v599 = vsub.s32 1, %v598
        %v600 = vrot.slane %v591, %v599
        %v601 = vlaneseq
        %v602 = vshrl.u32 %v601, 7
        %v603 = vsub.s32 2, %v602
        %v604 = vrot.slane %v591, %v603
        %v605 = vlaneseq
        %v606 = vshrl.u32 %v605, 7
        %v607 = vsub.s32 3, %v606
        %v608 = vrot.slane %v591, %v607
        %v645 = vunpack.c.l.b16 %v559
        %v646 = vunpack.c.h.b16 %v559
        %v647 = vunpack.c.l.b16 %v560
        %v648 = vunpack.c.h.b16 %v560
        %v649 = vunpack.c.l.b16 %v561
        %v650 = vunpack.c.h.b16 %v561
        %v651 = vunpack.c.l.b16 %v562
        %v652 = vunpack.c.h.b16 %v562
        %v653 = vunpack.c.l.b16 %v563
        %v654 = vunpack.c.h.b16 %v563
        %v655 = vunpack.c.l.b16 %v564
        %v656 = vunpack.c.h.b16 %v564
        %v657 = vunpack.c.l.b16 %v565
        %v658 = vunpack.c.h.b16 %v565
        %v659 = vunpack.c.l.b16 %v566
        %v660 = vunpack.c.h.b16 %v566
        %v661 = vunpack.c.l.b16 %v567
        %v662 = vunpack.c.h.b16 %v567
        %v663 = vunpack.c.l.b16 %v568
        %v664 = vunpack.c.h.b16 %v568
        %v665 = vunpack.c.l.b16 %v569
        %v666 = vunpack.c.h.b16 %v569
        %v667 = vunpack.c.l.b16 %v570
        %v668 = vunpack.c.h.b16 %v570
        %v669 = vunpack.c.l.b16 %v571
        %v670 = vunpack.c.h.b16 %v571
        %v671 = vunpack.c.l.b16 %v572
        %v672 = vunpack.c.h.b16 %v572
        %v673 = vunpack.c.l.b16 %v573
        %v674 = vunpack.c.h.b16 %v573
        %v675 = vunpack.c.l.b16 %v574
        %v676 = vunpack.c.h.b16 %v574
        %v677 = vunpack.c.l.b16 %v575
        %v678 = vunpack.c.h.b16 %v575
        %v679 = vunpack.c.l.b16 %v576
        %v680 = vunpack.c.h.b16 %v576
        %v681 = vunpack.c.l.b16 %v577
        %v682 = vunpack.c.h.b16 %v577
        %v683 = vunpack.c.l.b16 %v578
        %v684 = vunpack.c.h.b16 %v578
        %v685 = vunpack.c.l.b16 %v579
        %v686 = vunpack.c.h.b16 %v579
        %v687 = vunpack.c.l.b16 %v580
        %v688 = vunpack.c.h.b16 %v580
        %v689 = vunpack.c.l.b16 %v581
        %v690 = vunpack.c.h.b16 %v581
        %v691 = vunpack.c.l.b16 %v582
        %v692 = vunpack.c.h.b16 %v582
        %v693 = vunpack.c.l.b16 %v583
        %v694 = vunpack.c.h.b16 %v583
        %v695 = vunpack.c.l.b16 %v584
        %v696 = vunpack.c.h.b16 %v584
        %v697 = vunpack.c.l.b16 %v585
        %v698 = vunpack.c.h.b16 %v585
        %v699 = vunpack.c.l.b16 %v586
        %v700 = vunpack.c.h.b16 %v586
        %v701 = vunpack.c.l.b16 %v587
        %v702 = vunpack.c.h.b16 %v587
        %v703 = vunpack.c.l.b16 %v588
        %v704 = vunpack.c.h.b16 %v588
        %v705 = vunpack.c.l.b16 %v589
        %v706 = vunpack.c.h.b16 %v589
        %v707 = vunpack.c.l.b16 %v590
        %v708 = vunpack.c.h.b16 %v590
        %v709 = vpack.c.b16 %v649, %v645
        %v710 = vpack.c.b16 %v650, %v646
        %v711 = vpack.c.b16 %v651, %v647
        %v712 = vpack.c.b16 %v652, %v648
        %v713 = vpack.c.b16 %v657, %v653
        %v714 = vpack.c.b16 %v658, %v654
        %v715 = vpack.c.b16 %v659, %v655
        %v716 = vpack.c.b16 %v660, %v656
        %v717 = vpack.c.b16 %v665, %v661
        %v718 = vpack.c.b16 %v666, %v662
        %v719 = vpack.c.b16 %v667, %v663
        %v720 = vpack.c.b16 %v668, %v664
        %v721 = vpack.c.b16 %v673, %v669
        %v722 = vpack.c.b16 %v674, %v670
        %v723 = vpack.c.b16 %v675, %v671
        %v724 = vpack.c.b16 %v676, %v672
        %v725 = vpack.c.b16 %v681, %v677
        %v726 = vpack.c.b16 %v682, %v678
        %v727 = vpack.c.b16 %v683, %v679
        %v728 = vpack.c.b16 %v684, %v680
        %v729 = vpack.c.b16 %v689, %v685
        %v730 = vpack.c.b16 %v690, %v686
        %v731 = vpack.c.b16 %v691, %v687
        %v732 = vpack.c.b16 %v692, %v688
        %v733 = vpack.c.b16 %v697, %v693
        %v734 = vpack.c.b16 %v698, %v694
        %v735 = vpack.c.b16 %v699, %v695
        %v736 = vpack.c.b16 %v700, %v696
        %v737 = vpack.c.b16 %v705, %v701
        %v738 = vpack.c.b16 %v706, %v702
        %v739 = vpack.c.b16 %v707, %v703
        %v740 = vpack.c.b16 %v708, %v704
        %773 = vmatprep.subr.bf16.mxu0 %v710
        %774 = vmatpush1.bf16.msra.mxu0 %v709
        %775 = vmatprep.subr.bf16.mxu0 %v714
        %776 = vmatpush1.bf16.msra.mxu0 %v713
        %777 = vmatprep.subr.bf16.mxu0 %v718
        %778 = vmatpush1.bf16.msra.mxu0 %v717
        %779 = vmatprep.subr.bf16.mxu0 %v722
        %780 = vmatpush1.bf16.msra.mxu0 %v721
        %781 = vmatprep.subr.bf16.mxu0 %v726
        %782 = vmatpush1.bf16.msra.mxu0 %v725
        %783 = vmatprep.subr.bf16.mxu0 %v730
        %784 = vmatpush1.bf16.msra.mxu0 %v729
        %785 = vmatprep.subr.bf16.mxu0 %v734
        %786 = vmatpush1.bf16.msra.mxu0 %v733
        %787 = vmatprep.subr.bf16.mxu0 %v738
        %788 = vmatpush1.bf16.msra.mxu0 %v737
        %789 = vmatprep.subr.bf16.mxu0 0
        %790 = vmatpush1.bf16.msra.mxu0 0
        %791 = vmatprep.subr.bf16.mxu0 0
        %792 = vmatpush1.bf16.msra.mxu0 0
        %793 = vmatprep.subr.bf16.mxu0 0
        %794 = vmatpush1.bf16.msra.mxu0 0
        %795 = vmatprep.subr.bf16.mxu0 0
        %796 = vmatpush1.bf16.msra.mxu0 0
        %797 = vmatprep.subr.bf16.mxu0 0
        %798 = vmatpush1.bf16.msra.mxu0 0
        %799 = vmatprep.subr.bf16.mxu0 0
        %800 = vmatpush1.bf16.msra.mxu0 0
        %801 = vmatprep.subr.bf16.mxu0 0
        %802 = vmatpush1.bf16.msra.mxu0 0
        %803 = vmatprep.subr.bf16.mxu0 0
        %804 = vmatpush1.bf16.msra.mxu0 0
        %805 = vmatprep.mubr.bf16.mxu0 0
        %806 = vmatmul.mubr.bf16.gmra.mrb[0].mxu0 %v558
        %v807 = vpop.f32.mrb[0].mxu0
        %v808 = vadd.f32 %v596, %v807
        %v809 = vpop.f32.mrb[0].mxu0
        %v810 = vadd.f32 %v600, %v809
        %v811 = vpop.f32.mrb[0].mxu0
        %v812 = vpop.f32.mrb[0].mxu0
        %813 = vdwg.mxu0
        %814 = vmatprep.subr.bf16.mxu0 %v712
        %815 = vmatpush1.bf16.msra.mxu0 %v711
        %816 = vmatprep.subr.bf16.mxu0 %v716
        %817 = vmatpush1.bf16.msra.mxu0 %v715
        %818 = vmatprep.subr.bf16.mxu0 %v720
        %819 = vmatpush1.bf16.msra.mxu0 %v719
        %820 = vmatprep.subr.bf16.mxu0 %v724
        %821 = vmatpush1.bf16.msra.mxu0 %v723
        %822 = vmatprep.subr.bf16.mxu0 %v728
        %823 = vmatpush1.bf16.msra.mxu0 %v727
        %824 = vmatprep.subr.bf16.mxu0 %v732
        %825 = vmatpush1.bf16.msra.mxu0 %v731
        %826 = vmatprep.subr.bf16.mxu0 %v736
        %827 = vmatpush1.bf16.msra.mxu0 %v735
        %828 = vmatprep.subr.bf16.mxu0 %v740
        %829 = vmatpush1.bf16.msra.mxu0 %v739
        %830 = vmatprep.subr.bf16.mxu0 0
        %831 = vmatpush1.bf16.msra.mxu0 0
        %832 = vmatprep.subr.bf16.mxu0 0
        %833 = vmatpush1.bf16.msra.mxu0 0
        %834 = vmatprep.subr.bf16.mxu0 0
        %835 = vmatpush1.bf16.msra.mxu0 0
        %836 = vmatprep.subr.bf16.mxu0 0
        %837 = vmatpush1.bf16.msra.mxu0 0
        %838 = vmatprep.subr.bf16.mxu0 0
        %839 = vmatpush1.bf16.msra.mxu0 0
        %840 = vmatprep.subr.bf16.mxu0 0
        %841 = vmatpush1.bf16.msra.mxu0 0
        %842 = vmatprep.subr.bf16.mxu0 0
        %843 = vmatpush1.bf16.msra.mxu0 0
        %844 = vmatprep.subr.bf16.mxu0 0
        %845 = vmatpush1.bf16.msra.mxu0 0
        %846 = vmatprep.mubr.bf16.mxu0 0
        %847 = vmatmul.mubr.bf16.gmra.mrb[0].mxu0 %v558
        %v848 = vpop.f32.mrb[0].mxu0
        %v849 = vadd.f32 %v604, %v848
        %v850 = vpop.f32.mrb[0].mxu0
        %v851 = vadd.f32 %v608, %v850
        %v852 = vpop.f32.mrb[0].mxu0
        %v853 = vpop.f32.mrb[0].mxu0
        %854 = vdwg.mxu0
        %v855 = vmul.f32 %v808, 0.5
        %v856 = vmul.f32 %v810, 0.5
        %v857 = vmul.f32 %v849, 0.5
        %v858 = vmul.f32 %v851, 0.5
        %v859 = vmul.f32 %v808, 0.044715
        %v860 = vmul.f32 %v810, 0.044715
        %v861 = vmul.f32 %v849, 0.044715
        %v862 = vmul.f32 %v851, 0.044715
        %v863 = vmul.f32 %v859, %v808
        %v864 = vmul.f32 %v860, %v810
        %v865 = vmul.f32 %v861, %v849
        %v866 = vmul.f32 %v862, %v851
        %v867 = vmul.f32 %v863, %v808
        %v868 = vmul.f32 %v864, %v810
        %v869 = vmul.f32 %v865, %v849
        %v870 = vmul.f32 %v866, %v851
        %v871 = vadd.f32 %v808, %v867
        %v872 = vadd.f32 %v810, %v868
        %v873 = vadd.f32 %v849, %v869
        %v874 = vadd.f32 %v851, %v870
        %v875 = vmul.f32 %v871, 0.7978846
        %v876 = vmul.f32 %v872, 0.7978846
        %v877 = vmul.f32 %v873, 0.7978846
        %v878 = vmul.f32 %v874, 0.7978846
        %v879 = vtanh.pop %v875
        %v880 = vtanh.pop %v876
        %v881 = vtanh.pop %v877
        %v882 = vtanh.pop %v878
        %v883 = vadd.f32 %v879, 1.0
        %v884 = vadd.f32 %v880, 1.0
        %v885 = vadd.f32 %v881, 1.0
        %v886 = vadd.f32 %v882, 1.0
        %v887 = vmul.f32 %v855, %v883
        %v888 = vmul.f32 %v856, %v884
        %v889 = vmul.f32 %v857, %v885
        %v890 = vmul.f32 %v858, %v886
        %v891 = vpack.c.bf16 %v887, %v887
        %v892 = vpack.c.bf16 %v888, %v888
        %v893 = vpack.c.bf16 %v889, %v889
        %v894 = vpack.c.bf16 %v890, %v890
        %v895 = vld [vmem:[%s8] sm:$0xf]
        %v896 = vld [vmem:[%s8 + $0x4] sm:$0xf]
        %v897 = vld [vmem:[%s8 + $0x8] sm:$0xf]
        %v898 = vld [vmem:[%s8 + $0xc] sm:$0xf]
        %v899 = vld [vmem:[%s8 + $0x10] sm:$0xf]
        %v900 = vld [vmem:[%s8 + $0x14] sm:$0xf]
        %v901 = vld [vmem:[%s8 + $0x18] sm:$0xf]
        %v902 = vld [vmem:[%s8 + $0x1c] sm:$0xf]
        %v903 = vld [vmem:[%s8 + $0x20] sm:$0xf]
        %v904 = vld [vmem:[%s8 + $0x24] sm:$0xf]
        %v905 = vld [vmem:[%s8 + $0x28] sm:$0xf]
        %v906 = vld [vmem:[%s8 + $0x2c] sm:$0xf]
        %v907 = vld [vmem:[%s8 + $0x30] sm:$0xf]
        %v908 = vld [vmem:[%s8 + $0x34] sm:$0xf]
        %v909 = vld [vmem:[%s8 + $0x38] sm:$0xf]
        %v910 = vld [vmem:[%s8 + $0x3c] sm:$0xf]
        %v911 = vld [vmem:[%s8 + $0x40] sm:$0xf]
        %v912 = vld [vmem:[%s8 + $0x44] sm:$0xf]
        %v913 = vld [vmem:[%s8 + $0x48] sm:$0xf]
        %v914 = vld [vmem:[%s8 + $0x4c] sm:$0xf]
        %v915 = vld [vmem:[%s8 + $0x50] sm:$0xf]
        %v916 = vld [vmem:[%s8 + $0x54] sm:$0xf]
        %v917 = vld [vmem:[%s8 + $0x58] sm:$0xf]
        %v918 = vld [vmem:[%s8 + $0x5c] sm:$0xf]
        %v919 = vld [vmem:[%s8 + $0x60] sm:$0xf]
        %v920 = vld [vmem:[%s8 + $0x64] sm:$0xf]
        %v921 = vld [vmem:[%s8 + $0x68] sm:$0xf]
        %v922 = vld [vmem:[%s8 + $0x6c] sm:$0xf]
        %v923 = vld [vmem:[%s8 + $0x70] sm:$0xf]
        %v924 = vld [vmem:[%s8 + $0x74] sm:$0xf]
        %v925 = vld [vmem:[%s8 + $0x78] sm:$0xf]
        %v926 = vld [vmem:[%s8 + $0x7c] sm:$0xf]
        %v927 = vld [vmem:[%s8 + $0x80] sm:$0xf]
        %v928 = vld [vmem:[%s8 + $0x84] sm:$0xf]
        %v929 = vld [vmem:[%s8 + $0x88] sm:$0xf]
        %v930 = vld [vmem:[%s8 + $0x8c] sm:$0xf]
        %v931 = vld [vmem:[%s8 + $0x90] sm:$0xf]
        %v932 = vld [vmem:[%s8 + $0x94] sm:$0xf]
        %v933 = vld [vmem:[%s8 + $0x98] sm:$0xf]
        %v934 = vld [vmem:[%s8 + $0x9c] sm:$0xf]
        %v935 = vld [vmem:[%s8 + $0xa0] sm:$0xf]
        %v936 = vld [vmem:[%s8 + $0xa4] sm:$0xf]
        %v937 = vld [vmem:[%s8 + $0xa8] sm:$0xf]
        %v938 = vld [vmem:[%s8 + $0xac] sm:$0xf]
        %v939 = vld [vmem:[%s8 + $0xb0] sm:$0xf]
        %v940 = vld [vmem:[%s8 + $0xb4] sm:$0xf]
        %v941 = vld [vmem:[%s8 + $0xb8] sm:$0xf]
        %v942 = vld [vmem:[%s8 + $0xbc] sm:$0xf]
        %v943 = vld [vmem:[%s8 + $0xc0] sm:$0xf]
        %v944 = vld [vmem:[%s8 + $0xc4] sm:$0xf]
        %v945 = vld [vmem:[%s8 + $0xc8] sm:$0xf]
        %v946 = vld [vmem:[%s8 + $0xcc] sm:$0xf]
        %v947 = vld [vmem:[%s8 + $0xd0] sm:$0xf]
        %v948 = vld [vmem:[%s8 + $0xd4] sm:$0xf]
        %v949 = vld [vmem:[%s8 + $0xd8] sm:$0xf]
        %v950 = vld [vmem:[%s8 + $0xdc] sm:$0xf]
        %v951 = vld [vmem:[%s8 + $0xe0] sm:$0xf]
        %v952 = vld [vmem:[%s8 + $0xe4] sm:$0xf]
        %v953 = vld [vmem:[%s8 + $0xe8] sm:$0xf]
        %v954 = vld [vmem:[%s8 + $0xec] sm:$0xf]
        %v955 = vld [vmem:[%s8 + $0xf0] sm:$0xf]
        %v956 = vld [vmem:[%s8 + $0xf4] sm:$0xf]
        %v957 = vld [vmem:[%s8 + $0xf8] sm:$0xf]
        %v958 = vld [vmem:[%s8 + $0xfc] sm:$0xf]
        %v959 = vld [vmem:[%s9] sm:$0x1]
        %v961 = vlaneseq
        %v962 = vshrl.u32 %v961, 7
        %v963 = vsub.s32 0, %v962
        %v964 = vrot.slane %v959, %v963
        %v1030 = vunpack.c.l.b16 %v895
        %v1031 = vunpack.c.l.b16 %v896
        %v1032 = vunpack.c.l.b16 %v897
        %v1033 = vunpack.c.l.b16 %v898
        %v1034 = vunpack.c.l.b16 %v899
        %v1035 = vunpack.c.l.b16 %v900
        %v1036 = vunpack.c.l.b16 %v901
        %v1037 = vunpack.c.l.b16 %v902
        %v1038 = vunpack.c.l.b16 %v903
        %v1039 = vunpack.c.l.b16 %v904
        %v1040 = vunpack.c.l.b16 %v905
        %v1041 = vunpack.c.l.b16 %v906
        %v1042 = vunpack.c.l.b16 %v907
        %v1043 = vunpack.c.l.b16 %v908
        %v1044 = vunpack.c.l.b16 %v909
        %v1045 = vunpack.c.l.b16 %v910
        %v1046 = vunpack.c.l.b16 %v911
        %v1047 = vunpack.c.l.b16 %v912
        %v1048 = vunpack.c.l.b16 %v913
        %v1049 = vunpack.c.l.b16 %v914
        %v1050 = vunpack.c.l.b16 %v915
        %v1051 = vunpack.c.l.b16 %v916
        %v1052 = vunpack.c.l.b16 %v917
        %v1053 = vunpack.c.l.b16 %v918
        %v1054 = vunpack.c.l.b16 %v919
        %v1055 = vunpack.c.l.b16 %v920
        %v1056 = vunpack.c.l.b16 %v921
        %v1057 = vunpack.c.l.b16 %v922
        %v1058 = vunpack.c.l.b16 %v923
        %v1059 = vunpack.c.l.b16 %v924
        %v1060 = vunpack.c.l.b16 %v925
        %v1061 = vunpack.c.l.b16 %v926
        %v1062 = vunpack.c.l.b16 %v927
        %v1063 = vunpack.c.l.b16 %v928
        %v1064 = vunpack.c.l.b16 %v929
        %v1065 = vunpack.c.l.b16 %v930
        %v1066 = vunpack.c.l.b16 %v931
        %v1067 = vunpack.c.l.b16 %v932
        %v1068 = vunpack.c.l.b16 %v933
        %v1069 = vunpack.c.l.b16 %v934
        %v1070 = vunpack.c.l.b16 %v935
        %v1071 = vunpack.c.l.b16 %v936
        %v1072 = vunpack.c.l.b16 %v937
        %v1073 = vunpack.c.l.b16 %v938
        %v1074 = vunpack.c.l.b16 %v939
        %v1075 = vunpack.c.l.b16 %v940
        %v1076 = vunpack.c.l.b16 %v941
        %v1077 = vunpack.c.l.b16 %v942
        %v1078 = vunpack.c.l.b16 %v943
        %v1079 = vunpack.c.l.b16 %v944
        %v1080 = vunpack.c.l.b16 %v945
        %v1081 = vunpack.c.l.b16 %v946
        %v1082 = vunpack.c.l.b16 %v947
        %v1083 = vunpack.c.l.b16 %v948
        %v1084 = vunpack.c.l.b16 %v949
        %v1085 = vunpack.c.l.b16 %v950
        %v1086 = vunpack.c.l.b16 %v951
        %v1087 = vunpack.c.l.b16 %v952
        %v1088 = vunpack.c.l.b16 %v953
        %v1089 = vunpack.c.l.b16 %v954
        %v1090 = vunpack.c.l.b16 %v955
        %v1091 = vunpack.c.l.b16 %v956
        %v1092 = vunpack.c.l.b16 %v957
        %v1093 = vunpack.c.l.b16 %v958
        %v1094 = vpack.c.b16 %v1031, %v1030
        %v1095 = vpack.c.b16 %v1033, %v1032
        %v1096 = vpack.c.b16 %v1035, %v1034
        %v1097 = vpack.c.b16 %v1037, %v1036
        %v1098 = vpack.c.b16 %v1039, %v1038
        %v1099 = vpack.c.b16 %v1041, %v1040
        %v1100 = vpack.c.b16 %v1043, %v1042
        %v1101 = vpack.c.b16 %v1045, %v1044
        %v1102 = vpack.c.b16 %v1047, %v1046
        %v1103 = vpack.c.b16 %v1049, %v1048
        %v1104 = vpack.c.b16 %v1051, %v1050
        %v1105 = vpack.c.b16 %v1053, %v1052
        %v1106 = vpack.c.b16 %v1055, %v1054
        %v1107 = vpack.c.b16 %v1057, %v1056
        %v1108 = vpack.c.b16 %v1059, %v1058
        %v1109 = vpack.c.b16 %v1061, %v1060
        %v1110 = vpack.c.b16 %v1063, %v1062
        %v1111 = vpack.c.b16 %v1065, %v1064
        %v1112 = vpack.c.b16 %v1067, %v1066
        %v1113 = vpack.c.b16 %v1069, %v1068
        %v1114 = vpack.c.b16 %v1071, %v1070
        %v1115 = vpack.c.b16 %v1073, %v1072
        %v1116 = vpack.c.b16 %v1075, %v1074
        %v1117 = vpack.c.b16 %v1077, %v1076
        %v1118 = vpack.c.b16 %v1079, %v1078
        %v1119 = vpack.c.b16 %v1081, %v1080
        %v1120 = vpack.c.b16 %v1083, %v1082
        %v1121 = vpack.c.b16 %v1085, %v1084
        %v1122 = vpack.c.b16 %v1087, %v1086
        %v1123 = vpack.c.b16 %v1089, %v1088
        %v1124 = vpack.c.b16 %v1091, %v1090
        %v1125 = vpack.c.b16 %v1093, %v1092
        %1158 = vmatprep.subr.bf16.mxu0 0
        %1159 = vmatpush1.bf16.msra.mxu0 %v1094
        %1160 = vmatprep.subr.bf16.mxu0 0
        %1161 = vmatpush1.bf16.msra.mxu0 %v1095
        %1162 = vmatprep.subr.bf16.mxu0 0
        %1163 = vmatpush1.bf16.msra.mxu0 %v1096
        %1164 = vmatprep.subr.bf16.mxu0 0
        %1165 = vmatpush1.bf16.msra.mxu0 %v1097
        %1166 = vmatprep.subr.bf16.mxu0 0
        %1167 = vmatpush1.bf16.msra.mxu0 %v1098
        %1168 = vmatprep.subr.bf16.mxu0 0
        %1169 = vmatpush1.bf16.msra.mxu0 %v1099
        %1170 = vmatprep.subr.bf16.mxu0 0
        %1171 = vmatpush1.bf16.msra.mxu0 %v1100
        %1172 = vmatprep.subr.bf16.mxu0 0
        %1173 = vmatpush1.bf16.msra.mxu0 %v1101
        %1174 = vmatprep.subr.bf16.mxu0 0
        %1175 = vmatpush1.bf16.msra.mxu0 %v1102
        %1176 = vmatprep.subr.bf16.mxu0 0
        %1177 = vmatpush1.bf16.msra.mxu0 %v1103
        %1178 = vmatprep.subr.bf16.mxu0 0
        %1179 = vmatpush1.bf16.msra.mxu0 %v1104
        %1180 = vmatprep.subr.bf16.mxu0 0
        %1181 = vmatpush1.bf16.msra.mxu0 %v1105
        %1182 = vmatprep.subr.bf16.mxu0 0
        %1183 = vmatpush1.bf16.msra.mxu0 %v1106
        %1184 = vmatprep.subr.bf16.mxu0 0
        %1185 = vmatpush1.bf16.msra.mxu0 %v1107
        %1186 = vmatprep.subr.bf16.mxu0 0
        %1187 = vmatpush1.bf16.msra.mxu0 %v1108
        %1188 = vmatprep.subr.bf16.mxu0 0
        %1189 = vmatpush1.bf16.msra.mxu0 %v1109
        %1190 = vmatprep.mubr.bf16.mxu0 %v892
        %1191 = vmatmul.mubr.bf16.gmra.mrb[0].mxu0 %v891
        %v1192 = vpop.f32.mrb[0].mxu0
        %v1193 = vadd.f32 %v964, %v1192
        %v1194 = vpop.f32.mrb[0].mxu0
        %v1195 = vpop.f32.mrb[0].mxu0
        %v1196 = vpop.f32.mrb[0].mxu0
        %1197 = vdwg.mxu0
        %1198 = vmatprep.subr.bf16.mxu0 0
        %1199 = vmatpush1.bf16.msra.mxu0 %v1110
        %1200 = vmatprep.subr.bf16.mxu0 0
        %1201 = vmatpush1.bf16.msra.mxu0 %v1111
        %1202 = vmatprep.subr.bf16.mxu0 0
        %1203 = vmatpush1.bf16.msra.mxu0 %v1112
        %1204 = vmatprep.subr.bf16.mxu0 0
        %1205 = vmatpush1.bf16.msra.mxu0 %v1113
        %1206 = vmatprep.subr.bf16.mxu0 0
        %1207 = vmatpush1.bf16.msra.mxu0 %v1114
        %1208 = vmatprep.subr.bf16.mxu0 0
        %1209 = vmatpush1.bf16.msra.mxu0 %v1115
        %1210 = vmatprep.subr.bf16.mxu0 0
        %1211 = vmatpush1.bf16.msra.mxu0 %v1116
        %1212 = vmatprep.subr.bf16.mxu0 0
        %1213 = vmatpush1.bf16.msra.mxu0 %v1117
        %1214 = vmatprep.subr.bf16.mxu0 0
        %1215 = vmatpush1.bf16.msra.mxu0 %v1118
        %1216 = vmatprep.subr.bf16.mxu0 0
        %1217 = vmatpush1.bf16.msra.mxu0 %v1119
        %1218 = vmatprep.subr.bf16.mxu0 0
        %1219 = vmatpush1.bf16.msra.mxu0 %v1120
        %1220 = vmatprep.subr.bf16.mxu0 0
        %1221 = vmatpush1.bf16.msra.mxu0 %v1121
        %1222 = vmatprep.subr.bf16.mxu0 0
        %1223 = vmatpush1.bf16.msra.mxu0 %v1122
        %1224 = vmatprep.subr.bf16.mxu0 0
        %1225 = vmatpush1.bf16.msra.mxu0 %v1123
        %1226 = vmatprep.subr.bf16.mxu0 0
        %1227 = vmatpush1.bf16.msra.mxu0 %v1124
        %1228 = vmatprep.subr.bf16.mxu0 0
        %1229 = vmatpush1.bf16.msra.mxu0 %v1125
        %1230 = vmatprep.mubr.bf16.mxu0 %v894
        %1231 = vmatmul.mubr.bf16.gmra.mrb[0].mxu0 %v893
        %v1232 = vpop.f32.mrb[0].mxu0
        %v1233 = vadd.f32 %v1193, %v1232
        %v1234 = vpop.f32.mrb[0].mxu0
        %v1235 = vpop.f32.mrb[0].mxu0
        %v1236 = vpop.f32.mrb[0].mxu0
        %1237 = vdwg.mxu0
        %v1238 = vadd.f32 %v529, %v1233
        %1239 = vst [vmem:[%s397] sm:$0xff] %v1238
        %s1240 = sand.u32 %s270, 1
        %s1241 = scalar_lea.sflag [#allocation3], %s1240
        %s1242 = sand.u32 %s270, 1
        %s1243 = smul.addr %s1242, 8
        %s1244 = scalar_lea.vmem [#allocation2], %s1243
        // Predicated region
        $region61: #{gpt2_block.5} parent=59 // pred_check
          %p1245 = pneg %p280
        $region62: #{gpt2_block.5} parent=59 // pred_check_branch
          %1247 = sbr.rel (%p1245) target = $region64
        $region63: #{gpt2_block.5} parent=59 // pred_region
          %s1249 = ssub.s32 128, 128
          %1250 = vsyncadd %s1241, %s1249
          %s1251 = smul.addr %s28, 2
          %s1252 = sadd.s32 %s29, %s1251
          %s1253 = smul.addr %s1252, 128
          %s1254 = scalar_lea.hbm %s10, %s1253
          %s1256 = sshll.u32 %s1244, 4
          %s1257 = int_to_ptr.vmem [resolvable:$true] %s1256
          %1259 = dma.vmem_to_hbm [thread:$0]  %s1257, 128, %s1254, %s1241
        $region64: #{gpt2_block.5} parent=59 // pred_fallthru
          _
      $region60: #{gpt2_block.5} parent=5 // pred_fallthru
        _
      %p1260 = scmp.le.s32.totalorder 2, %s19
      // Predicated region
      $region65: #{gpt2_block.5} parent=5 // pred_check
        %p1261 = pneg %p1260
      $region66: #{gpt2_block.5} parent=5 // pred_check_branch
        %1263 = sbr.rel (%p1261) target = $region68
      $region67: #{gpt2_block.5} parent=5 // pred_region
        %s1264 = ssub.s32 %s19, 2
        // Predicated region
        $region69: #{gpt2_block.5} parent=67 // pred_check
          %p1265 = pneg %p286
        $region70: #{gpt2_block.5} parent=67 // pred_check_branch
          %1267 = sbr.rel (%p1265) target = $region72
        $region71: #{gpt2_block.5} parent=67 // pred_region
          %s1268 = sand.u32 %s271, 1
          %s1269 = scalar_lea.sflag [#allocation3], %s1268
          %s1270 = sand.u32 %s271, 1
          %s1271 = smul.addr %s1270, 8
          %s1272 = scalar_lea.vmem [#allocation2], %s1271
          %1273 = dma.done %s1269, 128
        $region72: #{gpt2_block.5} parent=67 // pred_fallthru
          _
      $region68: #{gpt2_block.5} parent=5 // pred_fallthru
        _
    $region6: #{gpt2_block.5} parent=1 // loop_footer
      %s23 = sadd.s32 1, %s19
    $region7: #{gpt2_block.5} parent=1 // loop_footer_branch
      %18 = sbr.rel target = $region3
    $region8: #{gpt2_block.5} parent=1 // loop_exit
      _
    %1274 = vsyncpa [#allocation3], 1
    %s1275 = scalar_lea.sflag [#allocation3], 1
    %1276 = vsyncpa %s1275, 1

</llo_original>
